<compile_context>
chip_gen: v6e
topology: v6e:2x2x1
jax: 0.10.0
libtpu: 0.0.40
codegen_flags: <defaults>
</compile_context>

<pallas_src>
import functools

import jax
import jax.numpy as jnp
from jax import lax
from jax.experimental import pallas as pl
from jax.experimental.pallas import tpu as pltpu


def _round_up(x, m):
    return ((x + m - 1) // m) * m


def _fused_block_kernel(x_ref, w1_ref, w2_ref, o_ref,
                        xpad_ref, hpad_ref, lhs1_ref, lhs2_ref,
                        *, nb, cin, cout, hh, ww, kp1, kp2):
    # x_ref   : (nb, Cin, H, W)   NCHW input slab for this grid step
    # w1_ref  : (3*KP1, KP2)      conv1 banded weights (kh taps stacked on K)
    # w2_ref  : (3*KP2, KP2)      conv2 banded weights (kh taps stacked on K)
    # o_ref   : (nb, Cout, H, W)  NCHW output slab
    # xpad_ref: (nb*(H+2), KP1)   row-padded, (c,w)-on-lanes staged input
    # hpad_ref: (nb*(H+2), KP2)   row-padded ReLU(conv1) activation (VMEM only)
    # lhs1/2  : (M, 3*KP1/KP2)    fused-kh matmul LHS,  M = nb*(H+2) - 2
    p = hh + 2
    m = nb * p - 2

    # Zero the staging buffers every step: halo rows must be 0 for SAME
    # padding, and the never-written lane padding must at least be finite so
    # garbage * zero-weight-row cannot produce Inf*0 -> NaN.  Unconditional
    # (not pl.when(pid==0)) so it stays correct if the grid is ever split
    # across TensorCores with "parallel" semantics; with grid==1 it runs once.
    xpad_ref[...] = jnp.zeros_like(xpad_ref)
    hpad_ref[...] = jnp.zeros_like(hpad_ref)

    # ---- NCHW -> rows-on-sublanes, (c,w)-on-lanes (stays in VMEM) -----------
    for b in range(nb):
        for ci in range(cin):
            xpad_ref[b * p + 1:b * p + 1 + hh, ci * ww:(ci + 1) * ww] = (
                x_ref[b, ci, :, :].astype(xpad_ref.dtype))

    # ---- conv1 + ReLU: 3 kh taps fused into ONE lane-dense MXU matmul -------
    for kh in range(3):
        lhs1_ref[:, kh * kp1:(kh + 1) * kp1] = xpad_ref[kh:kh + m, :]
    act1 = jnp.maximum(
        jnp.dot(lhs1_ref[...], w1_ref[...],
                preferred_element_type=jnp.float32), 0.0)

    # Stage into the padded buffer per batch element so the inter-batch seam
    # rows (garbage conv outputs) never land on a halo row.
    for b in range(nb):
        hpad_ref[b * p + 1:b * p + 1 + hh, :] = (
            act1[b * p:b * p + hh, :].astype(hpad_ref.dtype))

    # ---- conv2 + ReLU: fused 3-tap matmul ------------------------------------
    for kh in range(3):
        lhs2_ref[:, kh * kp2:(kh + 1) * kp2] = hpad_ref[kh:kh + m, :]
    act2 = jnp.maximum(
        jnp.dot(lhs2_ref[...], w2_ref[...],
                preferred_element_type=jnp.float32), 0.0)

    # ---- pack back to NCHW (one (H, W) tile per output channel) -------------
    for b in range(nb):
        for co in range(cout):
            o_ref[b, co, :, :] = act2[b * p:b * p + hh,
                                      co * ww:(co + 1) * ww].astype(o_ref.dtype)


def _row_banded(w_hwio, width, kp_in, kp_out):
    """(3, 3, Cin, Cout) -> (3*kp_in, kp_out) fused banded weight matrix.

    banded[kh*kp_in + ci*W + wi, co*W + wo] = w[kh, kw, ci, co] with
    wi = wo + kw - 1 and zero where wi falls outside [0, W): this folds the kw
    taps AND the SAME width padding into the weights.  The 3 kh taps are
    stacked along the contraction axis (matching the fused LHS layout) and the
    per-tap contraction block is zero-padded to kp_in (a multiple of 128).
    """
    kh_n, kw_n, cin, cout = w_hwio.shape
    wi = jnp.arange(width)
    wo = jnp.arange(width)
    kw = jnp.arange(kw_n)
    # sel[kw, wi, wo] = 1 iff wi == wo + kw - 1  (padding = 1)
    sel = (wi[None, :, None] == (wo[None, None, :] + kw[:, None, None] - 1))
    sel = sel.astype(w_hwio.dtype)
    banded = jnp.einsum('kio,hkcd->hcido', sel, w_hwio)       # (kh,ci,wi,co,wo)
    banded = banded.reshape(kh_n, cin * width, cout * width)
    banded = jnp.pad(banded, ((0, 0),
                              (0, kp_in - cin * width),
                              (0, kp_out - cout * width)))
    return banded.reshape(kh_n * kp_in, kp_out)


def prepare_block_weights(w1_hwio, w2_hwio, width):
    """Build the fused banded weight matrices ONCE per layer (not per call)."""
    cin, cout = w1_hwio.shape[2], w1_hwio.shape[3]
    kp1 = _round_up(width * cin, 128)
    kp2 = _round_up(width * cout, 128)
    w1_banded = _row_banded(w1_hwio, width, kp1, kp2)   # (3*kp1, kp2)
    w2_banded = _row_banded(w2_hwio, width, kp2, kp2)   # (3*kp2, kp2)
    return w1_banded, w2_banded


def block_forward(x_nchw, w1_banded, w2_banded, out_channels, *,
                  batch_block=None):
    """Fused Conv3x3 -> ReLU -> Conv3x3 -> ReLU.  NCHW in, NCHW out."""
    n, cin, hh, ww = x_nchw.shape
    cout = out_channels
    kp1 = w1_banded.shape[0] // 3
    kp2 = w1_banded.shape[1]

    # Whole batch in one grid step by default (single-TC v5e/v6e: extra grid
    # steps are pure per-step overhead, and folding raises matmul M).
    # TODO(synk): on v7x (2 TensorCores) pass batch_block = n // 2 so the
    # 2-step "parallel" grid maps one block onto each core.
    nb = n if batch_block is None else batch_block
    assert n % nb == 0, "batch_block must divide the batch size"
    p = hh + 2
    m = nb * p - 2

    kernel = functools.partial(
        _fused_block_kernel, nb=nb, cin=cin, cout=cout, hh=hh, ww=ww,
        kp1=kp1, kp2=kp2)

    return pl.pallas_call(
        kernel,
        out_shape=jax.ShapeDtypeStruct((n, cout, hh, ww), x_nchw.dtype),
        grid_spec=pltpu.PrefetchScalarGridSpec(
            num_scalar_prefetch=0,
            grid=(n // nb,),
            in_specs=[
                pl.BlockSpec((nb, cin, hh, ww), lambda i: (i, 0, 0, 0)),
                pl.BlockSpec(w1_banded.shape, lambda i: (0, 0)),
                pl.BlockSpec(w2_banded.shape, lambda i: (0, 0)),
            ],
            out_specs=pl.BlockSpec((nb, cout, hh, ww), lambda i: (i, 0, 0, 0)),
            scratch_shapes=[
                pltpu.VMEM((nb * p, kp1), jnp.float32),
                pltpu.VMEM((nb * p, kp2), jnp.float32),
                pltpu.VMEM((m, 3 * kp1), jnp.float32),
                pltpu.VMEM((m, 3 * kp2), jnp.float32),
            ],
        ),
        compiler_params=pltpu.CompilerParams(
            dimension_semantics=("parallel",),
        ),
    )(x_nchw, w1_banded, w2_banded)


def _reference_block(x_nchw, w1_hwio, w2_hwio):
    """Pure-JAX reference (lax.conv) for a correctness check."""
    dn = lax.conv_dimension_numbers(x_nchw.shape, w1_hwio.shape,
                                    ("NCHW", "HWIO", "NCHW"))
    h = lax.conv_general_dilated(x_nchw, w1_hwio, (1, 1), "SAME",
                                 dimension_numbers=dn)
    h = jnp.maximum(h, 0.0)
    dn2 = lax.conv_dimension_numbers(h.shape, w2_hwio.shape,
                                     ("NCHW", "HWIO", "NCHW"))
    y = lax.conv_general_dilated(h, w2_hwio, (1, 1), "SAME",
                                 dimension_numbers=dn2)
    return jnp.maximum(y, 0.0)


if __name__ == "__main__":
    # Small shapes consistent with the module: batch=2, C_in=4, C_out=8, 16x16.
    N, C_IN, C_OUT, H, W = 2, 4, 8, 16, 16

    key = jax.random.PRNGKey(0)
    kx, kw1, kw2 = jax.random.split(key, 3)

    x = jax.random.normal(kx, (N, C_IN, H, W), dtype=jnp.float32)

    # Deterministic kaiming-like init; HWIO layout (3, 3, Cin, Cout), no bias.
    w1 = jax.random.normal(kw1, (3, 3, C_IN, C_OUT), dtype=jnp.float32) * (
        (2.0 / (C_IN * 9)) ** 0.5)
    w2 = jax.random.normal(kw2, (3, 3, C_OUT, C_OUT), dtype=jnp.float32) * (
        (2.0 / (C_OUT * 9)) ** 0.5)

    # Banded weights are built once per layer, outside the forward pass.
    w1b, w2b = prepare_block_weights(w1, w2, W)
    w1b, w2b = jax.block_until_ready((w1b, w2b))

    out = block_forward(x, w1b, w2b, C_OUT)
    out = jax.block_until_ready(out)

    ref = _reference_block(x, w1, w2)
    assert out.shape == (N, C_OUT, H, W), out.shape
    assert jnp.allclose(out, ref, atol=1e-3, rtol=1e-3), "mismatch vs reference"

    print("KERNEL_OK")
</pallas_src>

<mosaic_0001>
module attributes {stable_mosaic.version = 11 : i64} {
  func.func @_fused_block_kernel(%arg0: i32, %arg1: memref<2x4x16x16xf32, #tpu.memory_space<vmem>>, %arg2: memref<384x128xf32, #tpu.memory_space<vmem>>, %arg3: memref<384x128xf32, #tpu.memory_space<vmem>>, %arg4: memref<2x8x16x16xf32, #tpu.memory_space<vmem>>, %arg5: memref<36x128xf32, #tpu.memory_space<vmem>>, %arg6: memref<36x128xf32, #tpu.memory_space<vmem>>, %arg7: memref<34x384xf32, #tpu.memory_space<vmem>>, %arg8: memref<34x384xf32, #tpu.memory_space<vmem>>) attributes {dimension_semantics = [#tpu.dimension_semantics<parallel>], iteration_bounds = array<i64: 1>, scalar_prefetch = 0 : i64, scratch_operands = 4 : i64, tpu.core_type = #tpu.core_type<tc>, window_params = [{transform_indices = @transform_0, window_bounds = array<i64: 2, 4, 16, 16>}, {pipeline_mode = #tpu.pipeline_mode<synchronous>, transform_indices = @transform_1, window_bounds = array<i64: 384, 128>}, {pipeline_mode = #tpu.pipeline_mode<synchronous>, transform_indices = @transform_2, window_bounds = array<i64: 384, 128>}, {transform_indices = @transform_3, window_bounds = array<i64: 2, 8, 16, 16>}]} {
    %cst = arith.constant 0.000000e+00 : f32
    %0 = vector.broadcast %cst : f32 to vector<36x128xf32>
    %c0 = arith.constant 0 : index
    %c0_0 = arith.constant 0 : index
    %1 = vector.load %arg5[%c0, %c0_0] : memref<36x128xf32, #tpu.memory_space<vmem>>, vector<36x128xf32>
    tpu.vector_store %arg5[%c0, %c0_0], %0 {strides = array<i32>} : memref<36x128xf32, #tpu.memory_space<vmem>>, vector<36x128xf32>,
    %cst_1 = arith.constant 0.000000e+00 : f32
    %2 = vector.broadcast %cst_1 : f32 to vector<36x128xf32>
    %c0_2 = arith.constant 0 : index
    %c0_3 = arith.constant 0 : index
    %3 = vector.load %arg6[%c0_2, %c0_3] : memref<36x128xf32, #tpu.memory_space<vmem>>, vector<36x128xf32>
    tpu.vector_store %arg6[%c0_2, %c0_3], %2 {strides = array<i32>} : memref<36x128xf32, #tpu.memory_space<vmem>>, vector<36x128xf32>,
    %c0_4 = arith.constant 0 : index
    %c0_5 = arith.constant 0 : index
    %c0_6 = arith.constant 0 : index
    %c0_7 = arith.constant 0 : index
    %4 = vector.load %arg1[%c0_4, %c0_5, %c0_6, %c0_7] : memref<2x4x16x16xf32, #tpu.memory_space<vmem>>, vector<1x1x16x16xf32>
    %5 = vector.shape_cast %4 : vector<1x1x16x16xf32> to vector<16x16xf32>
    %c1 = arith.constant 1 : index
    %c0_8 = arith.constant 0 : index
    %6 = vector.load %arg5[%c1, %c0_8] : memref<36x128xf32, #tpu.memory_space<vmem>>, vector<16x16xf32>
    tpu.vector_store %arg5[%c1, %c0_8], %5 {strides = array<i32>} : memref<36x128xf32, #tpu.memory_space<vmem>>, vector<16x16xf32>,
    %c0_9 = arith.constant 0 : index
    %c1_10 = arith.constant 1 : index
    %c0_11 = arith.constant 0 : index
    %c0_12 = arith.constant 0 : index
    %7 = vector.load %arg1[%c0_9, %c1_10, %c0_11, %c0_12] : memref<2x4x16x16xf32, #tpu.memory_space<vmem>>, vector<1x1x16x16xf32>
    %8 = vector.shape_cast %7 : vector<1x1x16x16xf32> to vector<16x16xf32>
    %c1_13 = arith.constant 1 : index
    %c16 = arith.constant 16 : index
    %9 = vector.load %arg5[%c1_13, %c16] : memref<36x128xf32, #tpu.memory_space<vmem>>, vector<16x16xf32>
    tpu.vector_store %arg5[%c1_13, %c16], %8 {strides = array<i32>} : memref<36x128xf32, #tpu.memory_space<vmem>>, vector<16x16xf32>,
    %c0_14 = arith.constant 0 : index
    %c2 = arith.constant 2 : index
    %c0_15 = arith.constant 0 : index
    %c0_16 = arith.constant 0 : index
    %10 = vector.load %arg1[%c0_14, %c2, %c0_15, %c0_16] : memref<2x4x16x16xf32, #tpu.memory_space<vmem>>, vector<1x1x16x16xf32>
    %11 = vector.shape_cast %10 : vector<1x1x16x16xf32> to vector<16x16xf32>
    %c1_17 = arith.constant 1 : index
    %c32 = arith.constant 32 : index
    %12 = vector.load %arg5[%c1_17, %c32] : memref<36x128xf32, #tpu.memory_space<vmem>>, vector<16x16xf32>
    tpu.vector_store %arg5[%c1_17, %c32], %11 {strides = array<i32>} : memref<36x128xf32, #tpu.memory_space<vmem>>, vector<16x16xf32>,
    %c0_18 = arith.constant 0 : index
    %c3 = arith.constant 3 : index
    %c0_19 = arith.constant 0 : index
    %c0_20 = arith.constant 0 : index
    %13 = vector.load %arg1[%c0_18, %c3, %c0_19, %c0_20] : memref<2x4x16x16xf32, #tpu.memory_space<vmem>>, vector<1x1x16x16xf32>
    %14 = vector.shape_cast %13 : vector<1x1x16x16xf32> to vector<16x16xf32>
    %c1_21 = arith.constant 1 : index
    %c48 = arith.constant 48 : index
    %15 = vector.load %arg5[%c1_21, %c48] : memref<36x128xf32, #tpu.memory_space<vmem>>, vector<16x16xf32>
    tpu.vector_store %arg5[%c1_21, %c48], %14 {strides = array<i32>} : memref<36x128xf32, #tpu.memory_space<vmem>>, vector<16x16xf32>,
    %c1_22 = arith.constant 1 : index
    %c0_23 = arith.constant 0 : index
    %c0_24 = arith.constant 0 : index
    %c0_25 = arith.constant 0 : index
    %16 = vector.load %arg1[%c1_22, %c0_23, %c0_24, %c0_25] : memref<2x4x16x16xf32, #tpu.memory_space<vmem>>, vector<1x1x16x16xf32>
    %17 = vector.shape_cast %16 : vector<1x1x16x16xf32> to vector<16x16xf32>
    %c19 = arith.constant 19 : index
    %c0_26 = arith.constant 0 : index
    %18 = vector.load %arg5[%c19, %c0_26] : memref<36x128xf32, #tpu.memory_space<vmem>>, vector<16x16xf32>
    tpu.vector_store %arg5[%c19, %c0_26], %17 {strides = array<i32>} : memref<36x128xf32, #tpu.memory_space<vmem>>, vector<16x16xf32>,
    %c1_27 = arith.constant 1 : index
    %c1_28 = arith.constant 1 : index
    %c0_29 = arith.constant 0 : index
    %c0_30 = arith.constant 0 : index
    %19 = vector.load %arg1[%c1_27, %c1_28, %c0_29, %c0_30] : memref<2x4x16x16xf32, #tpu.memory_space<vmem>>, vector<1x1x16x16xf32>
    %20 = vector.shape_cast %19 : vector<1x1x16x16xf32> to vector<16x16xf32>
    %c19_31 = arith.constant 19 : index
    %c16_32 = arith.constant 16 : index
    %21 = vector.load %arg5[%c19_31, %c16_32] : memref<36x128xf32, #tpu.memory_space<vmem>>, vector<16x16xf32>
    tpu.vector_store %arg5[%c19_31, %c16_32], %20 {strides = array<i32>} : memref<36x128xf32, #tpu.memory_space<vmem>>, vector<16x16xf32>,
    %c1_33 = arith.constant 1 : index
    %c2_34 = arith.constant 2 : index
    %c0_35 = arith.constant 0 : index
    %c0_36 = arith.constant 0 : index
    %22 = vector.load %arg1[%c1_33, %c2_34, %c0_35, %c0_36] : memref<2x4x16x16xf32, #tpu.memory_space<vmem>>, vector<1x1x16x16xf32>
    %23 = vector.shape_cast %22 : vector<1x1x16x16xf32> to vector<16x16xf32>
    %c19_37 = arith.constant 19 : index
    %c32_38 = arith.constant 32 : index
    %24 = vector.load %arg5[%c19_37, %c32_38] : memref<36x128xf32, #tpu.memory_space<vmem>>, vector<16x16xf32>
    tpu.vector_store %arg5[%c19_37, %c32_38], %23 {strides = array<i32>} : memref<36x128xf32, #tpu.memory_space<vmem>>, vector<16x16xf32>,
    %c1_39 = arith.constant 1 : index
    %c3_40 = arith.constant 3 : index
    %c0_41 = arith.constant 0 : index
    %c0_42 = arith.constant 0 : index
    %25 = vector.load %arg1[%c1_39, %c3_40, %c0_41, %c0_42] : memref<2x4x16x16xf32, #tpu.memory_space<vmem>>, vector<1x1x16x16xf32>
    %26 = vector.shape_cast %25 : vector<1x1x16x16xf32> to vector<16x16xf32>
    %c19_43 = arith.constant 19 : index
    %c48_44 = arith.constant 48 : index
    %27 = vector.load %arg5[%c19_43, %c48_44] : memref<36x128xf32, #tpu.memory_space<vmem>>, vector<16x16xf32>
    tpu.vector_store %arg5[%c19_43, %c48_44], %26 {strides = array<i32>} : memref<36x128xf32, #tpu.memory_space<vmem>>, vector<16x16xf32>,
    %c0_45 = arith.constant 0 : index
    %c0_46 = arith.constant 0 : index
    %28 = vector.load %arg5[%c0_45, %c0_46] : memref<36x128xf32, #tpu.memory_space<vmem>>, vector<34x128xf32>
    %c0_47 = arith.constant 0 : index
    %c0_48 = arith.constant 0 : index
    %29 = vector.load %arg7[%c0_47, %c0_48] : memref<34x384xf32, #tpu.memory_space<vmem>>, vector<34x128xf32>
    tpu.vector_store %arg7[%c0_47, %c0_48], %28 {strides = array<i32>} : memref<34x384xf32, #tpu.memory_space<vmem>>, vector<34x128xf32>,
    %c1_49 = arith.constant 1 : index
    %c0_50 = arith.constant 0 : index
    %30 = vector.load %arg5[%c1_49, %c0_50] : memref<36x128xf32, #tpu.memory_space<vmem>>, vector<34x128xf32>
    %c0_51 = arith.constant 0 : index
    %c128 = arith.constant 128 : index
    %31 = vector.load %arg7[%c0_51, %c128] : memref<34x384xf32, #tpu.memory_space<vmem>>, vector<34x128xf32>
    tpu.vector_store %arg7[%c0_51, %c128], %30 {strides = array<i32>} : memref<34x384xf32, #tpu.memory_space<vmem>>, vector<34x128xf32>,
    %c2_52 = arith.constant 2 : index
    %c0_53 = arith.constant 0 : index
    %32 = vector.load %arg5[%c2_52, %c0_53] : memref<36x128xf32, #tpu.memory_space<vmem>>, vector<34x128xf32>
    %c0_54 = arith.constant 0 : index
    %c256 = arith.constant 256 : index
    %33 = vector.load %arg7[%c0_54, %c256] : memref<34x384xf32, #tpu.memory_space<vmem>>, vector<34x128xf32>
    tpu.vector_store %arg7[%c0_54, %c256], %32 {strides = array<i32>} : memref<34x384xf32, #tpu.memory_space<vmem>>, vector<34x128xf32>,
    %c0_55 = arith.constant 0 : index
    %c0_56 = arith.constant 0 : index
    %34 = vector.load %arg7[%c0_55, %c0_56] : memref<34x384xf32, #tpu.memory_space<vmem>>, vector<34x384xf32>
    %c0_57 = arith.constant 0 : index
    %c0_58 = arith.constant 0 : index
    %35 = vector.load %arg2[%c0_57, %c0_58] : memref<384x128xf32, #tpu.memory_space<vmem>>, vector<384x128xf32>
    %cst_59 = arith.constant dense<0.000000e+00> : vector<34x128xf32>
    %36 = tpu.matmul %34, %35, %cst_59 {dimension_numbers = #tpu.dot_dimension_numbers<[1], [0], [0], [1], [0, 0, 1, 1], [], []>} : vector<34x384xf32>, vector<384x128xf32>, vector<34x128xf32> -> vector<34x128xf32>
    %cst_60 = arith.constant 0.000000e+00 : f32
    %37 = vector.broadcast %cst_60 : f32 to vector<34x128xf32>
    %38 = arith.maximumf %36, %37 : vector<34x128xf32>
    %39 = vector.extract_strided_slice %38 {offsets = [0, 0], sizes = [16, 128], strides = [1, 1]} : vector<34x128xf32> to vector<16x128xf32>
    %c1_61 = arith.constant 1 : index
    %c0_62 = arith.constant 0 : index
    %40 = vector.load %arg6[%c1_61, %c0_62] : memref<36x128xf32, #tpu.memory_space<vmem>>, vector<16x128xf32>
    tpu.vector_store %arg6[%c1_61, %c0_62], %39 {strides = array<i32>} : memref<36x128xf32, #tpu.memory_space<vmem>>, vector<16x128xf32>,
    %41 = vector.extract_strided_slice %38 {offsets = [18, 0], sizes = [16, 128], strides = [1, 1]} : vector<34x128xf32> to vector<16x128xf32>
    %c19_63 = arith.constant 19 : index
    %c0_64 = arith.constant 0 : index
    %42 = vector.load %arg6[%c19_63, %c0_64] : memref<36x128xf32, #tpu.memory_space<vmem>>, vector<16x128xf32>
    tpu.vector_store %arg6[%c19_63, %c0_64], %41 {strides = array<i32>} : memref<36x128xf32, #tpu.memory_space<vmem>>, vector<16x128xf32>,
    %c0_65 = arith.constant 0 : index
    %c0_66 = arith.constant 0 : index
    %43 = vector.load %arg6[%c0_65, %c0_66] : memref<36x128xf32, #tpu.memory_space<vmem>>, vector<34x128xf32>
    %c0_67 = arith.constant 0 : index
    %c0_68 = arith.constant 0 : index
    %44 = vector.load %arg8[%c0_67, %c0_68] : memref<34x384xf32, #tpu.memory_space<vmem>>, vector<34x128xf32>
    tpu.vector_store %arg8[%c0_67, %c0_68], %43 {strides = array<i32>} : memref<34x384xf32, #tpu.memory_space<vmem>>, vector<34x128xf32>,
    %c1_69 = arith.constant 1 : index
    %c0_70 = arith.constant 0 : index
    %45 = vector.load %arg6[%c1_69, %c0_70] : memref<36x128xf32, #tpu.memory_space<vmem>>, vector<34x128xf32>
    %c0_71 = arith.constant 0 : index
    %c128_72 = arith.constant 128 : index
    %46 = vector.load %arg8[%c0_71, %c128_72] : memref<34x384xf32, #tpu.memory_space<vmem>>, vector<34x128xf32>
    tpu.vector_store %arg8[%c0_71, %c128_72], %45 {strides = array<i32>} : memref<34x384xf32, #tpu.memory_space<vmem>>, vector<34x128xf32>,
    %c2_73 = arith.constant 2 : index
    %c0_74 = arith.constant 0 : index
    %47 = vector.load %arg6[%c2_73, %c0_74] : memref<36x128xf32, #tpu.memory_space<vmem>>, vector<34x128xf32>
    %c0_75 = arith.constant 0 : index
    %c256_76 = arith.constant 256 : index
    %48 = vector.load %arg8[%c0_75, %c256_76] : memref<34x384xf32, #tpu.memory_space<vmem>>, vector<34x128xf32>
    tpu.vector_store %arg8[%c0_75, %c256_76], %47 {strides = array<i32>} : memref<34x384xf32, #tpu.memory_space<vmem>>, vector<34x128xf32>,
    %c0_77 = arith.constant 0 : index
    %c0_78 = arith.constant 0 : index
    %49 = vector.load %arg8[%c0_77, %c0_78] : memref<34x384xf32, #tpu.memory_space<vmem>>, vector<34x384xf32>
    %c0_79 = arith.constant 0 : index
    %c0_80 = arith.constant 0 : index
    %50 = vector.load %arg3[%c0_79, %c0_80] : memref<384x128xf32, #tpu.memory_space<vmem>>, vector<384x128xf32>
    %cst_81 = arith.constant dense<0.000000e+00> : vector<34x128xf32>
    %51 = tpu.matmul %49, %50, %cst_81 {dimension_numbers = #tpu.dot_dimension_numbers<[1], [0], [0], [1], [0, 0, 1, 1], [], []>} : vector<34x384xf32>, vector<384x128xf32>, vector<34x128xf32> -> vector<34x128xf32>
    %cst_82 = arith.constant 0.000000e+00 : f32
    %52 = vector.broadcast %cst_82 : f32 to vector<34x128xf32>
    %53 = arith.maximumf %51, %52 : vector<34x128xf32>
    %54 = vector.extract_strided_slice %53 {offsets = [0, 0], sizes = [16, 16], strides = [1, 1]} : vector<34x128xf32> to vector<16x16xf32>
    %c0_83 = arith.constant 0 : index
    %c0_84 = arith.constant 0 : index
    %c0_85 = arith.constant 0 : index
    %c0_86 = arith.constant 0 : index
    %55 = vector.load %arg4[%c0_83, %c0_84, %c0_85, %c0_86] : memref<2x8x16x16xf32, #tpu.memory_space<vmem>>, vector<1x1x16x16xf32>
    %56 = vector.shape_cast %55 : vector<1x1x16x16xf32> to vector<16x16xf32>
    %57 = vector.shape_cast %54 : vector<16x16xf32> to vector<1x1x16x16xf32>
    tpu.vector_store %arg4[%c0_83, %c0_84, %c0_85, %c0_86], %57 {strides = array<i32>} : memref<2x8x16x16xf32, #tpu.memory_space<vmem>>, vector<1x1x16x16xf32>,
    %58 = vector.extract_strided_slice %53 {offsets = [0, 16], sizes = [16, 16], strides = [1, 1]} : vector<34x128xf32> to vector<16x16xf32>
    %c0_87 = arith.constant 0 : index
    %c1_88 = arith.constant 1 : index
    %c0_89 = arith.constant 0 : index
    %c0_90 = arith.constant 0 : index
    %59 = vector.load %arg4[%c0_87, %c1_88, %c0_89, %c0_90] : memref<2x8x16x16xf32, #tpu.memory_space<vmem>>, vector<1x1x16x16xf32>
    %60 = vector.shape_cast %59 : vector<1x1x16x16xf32> to vector<16x16xf32>
    %61 = vector.shape_cast %58 : vector<16x16xf32> to vector<1x1x16x16xf32>
    tpu.vector_store %arg4[%c0_87, %c1_88, %c0_89, %c0_90], %61 {strides = array<i32>} : memref<2x8x16x16xf32, #tpu.memory_space<vmem>>, vector<1x1x16x16xf32>,
    %62 = vector.extract_strided_slice %53 {offsets = [0, 32], sizes = [16, 16], strides = [1, 1]} : vector<34x128xf32> to vector<16x16xf32>
    %c0_91 = arith.constant 0 : index
    %c2_92 = arith.constant 2 : index
    %c0_93 = arith.constant 0 : index
    %c0_94 = arith.constant 0 : index
    %63 = vector.load %arg4[%c0_91, %c2_92, %c0_93, %c0_94] : memref<2x8x16x16xf32, #tpu.memory_space<vmem>>, vector<1x1x16x16xf32>
    %64 = vector.shape_cast %63 : vector<1x1x16x16xf32> to vector<16x16xf32>
    %65 = vector.shape_cast %62 : vector<16x16xf32> to vector<1x1x16x16xf32>
    tpu.vector_store %arg4[%c0_91, %c2_92, %c0_93, %c0_94], %65 {strides = array<i32>} : memref<2x8x16x16xf32, #tpu.memory_space<vmem>>, vector<1x1x16x16xf32>,
    %66 = vector.extract_strided_slice %53 {offsets = [0, 48], sizes = [16, 16], strides = [1, 1]} : vector<34x128xf32> to vector<16x16xf32>
    %c0_95 = arith.constant 0 : index
    %c3_96 = arith.constant 3 : index
    %c0_97 = arith.constant 0 : index
    %c0_98 = arith.constant 0 : index
    %67 = vector.load %arg4[%c0_95, %c3_96, %c0_97, %c0_98] : memref<2x8x16x16xf32, #tpu.memory_space<vmem>>, vector<1x1x16x16xf32>
    %68 = vector.shape_cast %67 : vector<1x1x16x16xf32> to vector<16x16xf32>
    %69 = vector.shape_cast %66 : vector<16x16xf32> to vector<1x1x16x16xf32>
    tpu.vector_store %arg4[%c0_95, %c3_96, %c0_97, %c0_98], %69 {strides = array<i32>} : memref<2x8x16x16xf32, #tpu.memory_space<vmem>>, vector<1x1x16x16xf32>,
    %70 = vector.extract_strided_slice %53 {offsets = [0, 64], sizes = [16, 16], strides = [1, 1]} : vector<34x128xf32> to vector<16x16xf32>
    %c0_99 = arith.constant 0 : index
    %c4 = arith.constant 4 : index
    %c0_100 = arith.constant 0 : index
    %c0_101 = arith.constant 0 : index
    %71 = vector.load %arg4[%c0_99, %c4, %c0_100, %c0_101] : memref<2x8x16x16xf32, #tpu.memory_space<vmem>>, vector<1x1x16x16xf32>
    %72 = vector.shape_cast %71 : vector<1x1x16x16xf32> to vector<16x16xf32>
    %73 = vector.shape_cast %70 : vector<16x16xf32> to vector<1x1x16x16xf32>
    tpu.vector_store %arg4[%c0_99, %c4, %c0_100, %c0_101], %73 {strides = array<i32>} : memref<2x8x16x16xf32, #tpu.memory_space<vmem>>, vector<1x1x16x16xf32>,
    %74 = vector.extract_strided_slice %53 {offsets = [0, 80], sizes = [16, 16], strides = [1, 1]} : vector<34x128xf32> to vector<16x16xf32>
    %c0_102 = arith.constant 0 : index
    %c5 = arith.constant 5 : index
    %c0_103 = arith.constant 0 : index
    %c0_104 = arith.constant 0 : index
    %75 = vector.load %arg4[%c0_102, %c5, %c0_103, %c0_104] : memref<2x8x16x16xf32, #tpu.memory_space<vmem>>, vector<1x1x16x16xf32>
    %76 = vector.shape_cast %75 : vector<1x1x16x16xf32> to vector<16x16xf32>
    %77 = vector.shape_cast %74 : vector<16x16xf32> to vector<1x1x16x16xf32>
    tpu.vector_store %arg4[%c0_102, %c5, %c0_103, %c0_104], %77 {strides = array<i32>} : memref<2x8x16x16xf32, #tpu.memory_space<vmem>>, vector<1x1x16x16xf32>,
    %78 = vector.extract_strided_slice %53 {offsets = [0, 96], sizes = [16, 16], strides = [1, 1]} : vector<34x128xf32> to vector<16x16xf32>
    %c0_105 = arith.constant 0 : index
    %c6 = arith.constant 6 : index
    %c0_106 = arith.constant 0 : index
    %c0_107 = arith.constant 0 : index
    %79 = vector.load %arg4[%c0_105, %c6, %c0_106, %c0_107] : memref<2x8x16x16xf32, #tpu.memory_space<vmem>>, vector<1x1x16x16xf32>
    %80 = vector.shape_cast %79 : vector<1x1x16x16xf32> to vector<16x16xf32>
    %81 = vector.shape_cast %78 : vector<16x16xf32> to vector<1x1x16x16xf32>
    tpu.vector_store %arg4[%c0_105, %c6, %c0_106, %c0_107], %81 {strides = array<i32>} : memref<2x8x16x16xf32, #tpu.memory_space<vmem>>, vector<1x1x16x16xf32>,
    %82 = vector.extract_strided_slice %53 {offsets = [0, 112], sizes = [16, 16], strides = [1, 1]} : vector<34x128xf32> to vector<16x16xf32>
    %c0_108 = arith.constant 0 : index
    %c7 = arith.constant 7 : index
    %c0_109 = arith.constant 0 : index
    %c0_110 = arith.constant 0 : index
    %83 = vector.load %arg4[%c0_108, %c7, %c0_109, %c0_110] : memref<2x8x16x16xf32, #tpu.memory_space<vmem>>, vector<1x1x16x16xf32>
    %84 = vector.shape_cast %83 : vector<1x1x16x16xf32> to vector<16x16xf32>
    %85 = vector.shape_cast %82 : vector<16x16xf32> to vector<1x1x16x16xf32>
    tpu.vector_store %arg4[%c0_108, %c7, %c0_109, %c0_110], %85 {strides = array<i32>} : memref<2x8x16x16xf32, #tpu.memory_space<vmem>>, vector<1x1x16x16xf32>,
    %86 = vector.extract_strided_slice %53 {offsets = [18, 0], sizes = [16, 16], strides = [1, 1]} : vector<34x128xf32> to vector<16x16xf32>
    %c1_111 = arith.constant 1 : index
    %c0_112 = arith.constant 0 : index
    %c0_113 = arith.constant 0 : index
    %c0_114 = arith.constant 0 : index
    %87 = vector.load %arg4[%c1_111, %c0_112, %c0_113, %c0_114] : memref<2x8x16x16xf32, #tpu.memory_space<vmem>>, vector<1x1x16x16xf32>
    %88 = vector.shape_cast %87 : vector<1x1x16x16xf32> to vector<16x16xf32>
    %89 = vector.shape_cast %86 : vector<16x16xf32> to vector<1x1x16x16xf32>
    tpu.vector_store %arg4[%c1_111, %c0_112, %c0_113, %c0_114], %89 {strides = array<i32>} : memref<2x8x16x16xf32, #tpu.memory_space<vmem>>, vector<1x1x16x16xf32>,
    %90 = vector.extract_strided_slice %53 {offsets = [18, 16], sizes = [16, 16], strides = [1, 1]} : vector<34x128xf32> to vector<16x16xf32>
    %c1_115 = arith.constant 1 : index
    %c1_116 = arith.constant 1 : index
    %c0_117 = arith.constant 0 : index
    %c0_118 = arith.constant 0 : index
    %91 = vector.load %arg4[%c1_115, %c1_116, %c0_117, %c0_118] : memref<2x8x16x16xf32, #tpu.memory_space<vmem>>, vector<1x1x16x16xf32>
    %92 = vector.shape_cast %91 : vector<1x1x16x16xf32> to vector<16x16xf32>
    %93 = vector.shape_cast %90 : vector<16x16xf32> to vector<1x1x16x16xf32>
    tpu.vector_store %arg4[%c1_115, %c1_116, %c0_117, %c0_118], %93 {strides = array<i32>} : memref<2x8x16x16xf32, #tpu.memory_space<vmem>>, vector<1x1x16x16xf32>,
    %94 = vector.extract_strided_slice %53 {offsets = [18, 32], sizes = [16, 16], strides = [1, 1]} : vector<34x128xf32> to vector<16x16xf32>
    %c1_119 = arith.constant 1 : index
    %c2_120 = arith.constant 2 : index
    %c0_121 = arith.constant 0 : index
    %c0_122 = arith.constant 0 : index
    %95 = vector.load %arg4[%c1_119, %c2_120, %c0_121, %c0_122] : memref<2x8x16x16xf32, #tpu.memory_space<vmem>>, vector<1x1x16x16xf32>
    %96 = vector.shape_cast %95 : vector<1x1x16x16xf32> to vector<16x16xf32>
    %97 = vector.shape_cast %94 : vector<16x16xf32> to vector<1x1x16x16xf32>
    tpu.vector_store %arg4[%c1_119, %c2_120, %c0_121, %c0_122], %97 {strides = array<i32>} : memref<2x8x16x16xf32, #tpu.memory_space<vmem>>, vector<1x1x16x16xf32>,
    %98 = vector.extract_strided_slice %53 {offsets = [18, 48], sizes = [16, 16], strides = [1, 1]} : vector<34x128xf32> to vector<16x16xf32>
    %c1_123 = arith.constant 1 : index
    %c3_124 = arith.constant 3 : index
    %c0_125 = arith.constant 0 : index
    %c0_126 = arith.constant 0 : index
    %99 = vector.load %arg4[%c1_123, %c3_124, %c0_125, %c0_126] : memref<2x8x16x16xf32, #tpu.memory_space<vmem>>, vector<1x1x16x16xf32>
    %100 = vector.shape_cast %99 : vector<1x1x16x16xf32> to vector<16x16xf32>
    %101 = vector.shape_cast %98 : vector<16x16xf32> to vector<1x1x16x16xf32>
    tpu.vector_store %arg4[%c1_123, %c3_124, %c0_125, %c0_126], %101 {strides = array<i32>} : memref<2x8x16x16xf32, #tpu.memory_space<vmem>>, vector<1x1x16x16xf32>,
    %102 = vector.extract_strided_slice %53 {offsets = [18, 64], sizes = [16, 16], strides = [1, 1]} : vector<34x128xf32> to vector<16x16xf32>
    %c1_127 = arith.constant 1 : index
    %c4_128 = arith.constant 4 : index
    %c0_129 = arith.constant 0 : index
    %c0_130 = arith.constant 0 : index
    %103 = vector.load %arg4[%c1_127, %c4_128, %c0_129, %c0_130] : memref<2x8x16x16xf32, #tpu.memory_space<vmem>>, vector<1x1x16x16xf32>
    %104 = vector.shape_cast %103 : vector<1x1x16x16xf32> to vector<16x16xf32>
    %105 = vector.shape_cast %102 : vector<16x16xf32> to vector<1x1x16x16xf32>
    tpu.vector_store %arg4[%c1_127, %c4_128, %c0_129, %c0_130], %105 {strides = array<i32>} : memref<2x8x16x16xf32, #tpu.memory_space<vmem>>, vector<1x1x16x16xf32>,
    %106 = vector.extract_strided_slice %53 {offsets = [18, 80], sizes = [16, 16], strides = [1, 1]} : vector<34x128xf32> to vector<16x16xf32>
    %c1_131 = arith.constant 1 : index
    %c5_132 = arith.constant 5 : index
    %c0_133 = arith.constant 0 : index
    %c0_134 = arith.constant 0 : index
    %107 = vector.load %arg4[%c1_131, %c5_132, %c0_133, %c0_134] : memref<2x8x16x16xf32, #tpu.memory_space<vmem>>, vector<1x1x16x16xf32>
    %108 = vector.shape_cast %107 : vector<1x1x16x16xf32> to vector<16x16xf32>
    %109 = vector.shape_cast %106 : vector<16x16xf32> to vector<1x1x16x16xf32>
    tpu.vector_store %arg4[%c1_131, %c5_132, %c0_133, %c0_134], %109 {strides = array<i32>} : memref<2x8x16x16xf32, #tpu.memory_space<vmem>>, vector<1x1x16x16xf32>,
    %110 = vector.extract_strided_slice %53 {offsets = [18, 96], sizes = [16, 16], strides = [1, 1]} : vector<34x128xf32> to vector<16x16xf32>
    %c1_135 = arith.constant 1 : index
    %c6_136 = arith.constant 6 : index
    %c0_137 = arith.constant 0 : index
    %c0_138 = arith.constant 0 : index
    %111 = vector.load %arg4[%c1_135, %c6_136, %c0_137, %c0_138] : memref<2x8x16x16xf32, #tpu.memory_space<vmem>>, vector<1x1x16x16xf32>
    %112 = vector.shape_cast %111 : vector<1x1x16x16xf32> to vector<16x16xf32>
    %113 = vector.shape_cast %110 : vector<16x16xf32> to vector<1x1x16x16xf32>
    tpu.vector_store %arg4[%c1_135, %c6_136, %c0_137, %c0_138], %113 {strides = array<i32>} : memref<2x8x16x16xf32, #tpu.memory_space<vmem>>, vector<1x1x16x16xf32>,
    %114 = vector.extract_strided_slice %53 {offsets = [18, 112], sizes = [16, 16], strides = [1, 1]} : vector<34x128xf32> to vector<16x16xf32>
    %c1_139 = arith.constant 1 : index
    %c7_140 = arith.constant 7 : index
    %c0_141 = arith.constant 0 : index
    %c0_142 = arith.constant 0 : index
    %115 = vector.load %arg4[%c1_139, %c7_140, %c0_141, %c0_142] : memref<2x8x16x16xf32, #tpu.memory_space<vmem>>, vector<1x1x16x16xf32>
    %116 = vector.shape_cast %115 : vector<1x1x16x16xf32> to vector<16x16xf32>
    %117 = vector.shape_cast %114 : vector<16x16xf32> to vector<1x1x16x16xf32>
    tpu.vector_store %arg4[%c1_139, %c7_140, %c0_141, %c0_142], %117 {strides = array<i32>} : memref<2x8x16x16xf32, #tpu.memory_space<vmem>>, vector<1x1x16x16xf32>,
    return
  }
  func.func @transform_0(%arg0: i32) -> (i32, i32, i32, i32) {
    %c0_i32 = arith.constant 0 : i32
    %c0_i32_0 = arith.constant 0 : i32
    %c0_i32_1 = arith.constant 0 : i32
    %c0_i32_2 = arith.constant 0 : i32
    return %arg0, %c0_i32, %c0_i32_0, %c0_i32_1 : i32, i32, i32, i32
  }
  func.func @transform_1(%arg0: i32) -> (i32, i32) {
    %c0_i32 = arith.constant 0 : i32
    %c0_i32_0 = arith.constant 0 : i32
    %c0_i32_1 = arith.constant 0 : i32
    return %c0_i32, %c0_i32_0 : i32, i32
  }
  func.func @transform_2(%arg0: i32) -> (i32, i32) {
    %c0_i32 = arith.constant 0 : i32
    %c0_i32_0 = arith.constant 0 : i32
    %c0_i32_1 = arith.constant 0 : i32
    return %c0_i32, %c0_i32_0 : i32, i32
  }
  func.func @transform_3(%arg0: i32) -> (i32, i32, i32, i32) {
    %c0_i32 = arith.constant 0 : i32
    %c0_i32_0 = arith.constant 0 : i32
    %c0_i32_1 = arith.constant 0 : i32
    %c0_i32_2 = arith.constant 0 : i32
    return %arg0, %c0_i32, %c0_i32_0, %c0_i32_1 : i32, i32, i32, i32
  }
}

</mosaic_0001>

<llo_original>
// kernel: tpu_custom_call.1
$region0: #{tpu_custom_call.1}
  #allocation0 [shape = 'u32[]', space=smem, size = 0x4, offset = 0x4, fixed_abs, tag = 'smem constant byte address 0x4 - core index']
  #allocation1 [shape = 'u32[144,128]{1,0:T(1,128)}', space=vmem, size = 0x12000, scoped, tag = 'internal scratch']
  #allocation2 [shape = 'f32[36,128]{1,0:T(8,128)}', space=vmem, size = 0x5000, scoped, tag = 'scratch operand']
  #allocation3 [shape = 'f32[36,128]{1,0:T(8,128)}', space=vmem, size = 0x5000, scoped, tag = 'scratch operand']
  #allocation4 [shape = 'f32[34,384]{1,0:T(8,128)}', space=vmem, size = 0xf000, scoped, tag = 'scratch operand']
  #allocation5 [shape = 'f32[34,384]{1,0:T(8,128)}', space=vmem, size = 0xf000, scoped, tag = 'scratch operand']
  %s0 = inlined_call_operand.hbm [shape: f32[2,4,16,16], index: 0, kind: input, shape index: {}]
  %s1 = inlined_call_operand.hbm [shape: f32[384,128], index: 1, kind: input, shape index: {}]
  %s2 = inlined_call_operand.hbm [shape: f32[384,128], index: 2, kind: input, shape index: {}]
  %s3 = inlined_call_operand.hbm [shape: f32[2,8,16,16], index: 3, kind: output, shape index: {}]
  %s4 = sld [smem:[#allocation0]]
  $region34: #{tpu_custom_call.1} parent=0
    _
  %s6 = ssub.s32 1, %s4
  %s7 = scalar_select 0, %s6, %s4
  $region1: #{tpu_custom_call.1} parent=0
    #allocation6 [shape = 'u8[65536]{0}', space=vmem, size = 0x10000, scoped, tag = 'input window, operand 0, single buffered']
    #allocation7 [shape = 's32[1]{0}', space=sflag, size = 0x4, scoped, tag = 'scoped memory for tpu_custom_call.1']
    #allocation8 [shape = 's32[1]{0}', space=sflag, size = 0x4, scoped, tag = 'scoped memory for tpu_custom_call.1']
    #allocation9 [shape = 'u8[196608]{0}', space=vmem, size = 0x30000, scoped, tag = 'input window, operand 1, single buffered']
    #allocation10 [shape = 's32[1]{0}', space=sflag, size = 0x4, scoped, tag = 'scoped memory for tpu_custom_call.1']
    #allocation11 [shape = 'u8[196608]{0}', space=vmem, size = 0x30000, scoped, tag = 'input window, operand 2, single buffered']
    #allocation12 [shape = 'u8[131072]{0}', space=vmem, size = 0x20000, scoped, tag = 'output window, operand 0, single buffered']
    %8 = vsyncpa [#allocation7], 0
    %9 = vsyncpa [#allocation10], 0
    %10 = vsyncpa [#allocation8], 0
    // Predicated region
    $region2: #{tpu_custom_call.1} parent=1 // pred_check
      _
    $region3: #{tpu_custom_call.1} parent=1 // pred_check_branch
      %12 = sbr.rel (0) target = $region5
    $region4: #{tpu_custom_call.1} parent=1 // pred_region
      %s14 = ssub.s32 2048, 2048
      %15 = vsyncadd [#allocation7], %s14
      %s16 = sshll.u32 [#allocation6], 4
      %s17 = int_to_ptr.vmem [resolvable:$true] %s16
      %22 = dma.hbm_to_vmem [thread:$0]  %s0, 2048, %s17, [#allocation7], 128, 128, 8
    $region5: #{tpu_custom_call.1} parent=1 // pred_fallthru
      _
    // Predicated region
    $region6: #{tpu_custom_call.1} parent=1 // pred_check
      _
    $region7: #{tpu_custom_call.1} parent=1 // pred_check_branch
      %24 = sbr.rel (0) target = $region9
    $region8: #{tpu_custom_call.1} parent=1 // pred_region
      %s26 = ssub.s32 6144, 6144
      %27 = vsyncadd [#allocation10], %s26
      %s28 = sshll.u32 [#allocation9], 4
      %s29 = int_to_ptr.vmem [resolvable:$true] %s28
      %34 = dma.hbm_to_vmem [thread:$0]  %s1, 6144, %s29, [#allocation10], 128, 128, 8
    $region9: #{tpu_custom_call.1} parent=1 // pred_fallthru
      _
    // Predicated region
    $region10: #{tpu_custom_call.1} parent=1 // pred_check
      _
    $region11: #{tpu_custom_call.1} parent=1 // pred_check_branch
      %36 = sbr.rel (0) target = $region13
    $region12: #{tpu_custom_call.1} parent=1 // pred_region
      %s38 = ssub.s32 6144, 6144
      %39 = vsyncadd [#allocation10], %s38
      %s40 = sshll.u32 [#allocation11], 4
      %s41 = int_to_ptr.vmem [resolvable:$true] %s40
      %46 = dma.hbm_to_vmem [thread:$0]  %s2, 6144, %s41, [#allocation10], 128, 128, 8
    $region13: #{tpu_custom_call.1} parent=1 // pred_fallthru
      _
    // Predicated region
    $region14: #{tpu_custom_call.1} parent=1 // pred_check
      _
    $region15: #{tpu_custom_call.1} parent=1 // pred_check_branch
      %48 = sbr.rel (0) target = $region17
    $region16: #{tpu_custom_call.1} parent=1 // pred_region
      %49 = dma.done [#allocation7], 2048
    $region17: #{tpu_custom_call.1} parent=1 // pred_fallthru
      _
    // Predicated region
    $region18: #{tpu_custom_call.1} parent=1 // pred_check
      _
    $region19: #{tpu_custom_call.1} parent=1 // pred_check_branch
      %51 = sbr.rel (0) target = $region21
    $region20: #{tpu_custom_call.1} parent=1 // pred_region
      %52 = dma.done [#allocation10], 6144
    $region21: #{tpu_custom_call.1} parent=1 // pred_fallthru
      _
    // Predicated region
    $region22: #{tpu_custom_call.1} parent=1 // pred_check
      _
    $region23: #{tpu_custom_call.1} parent=1 // pred_check_branch
      %54 = sbr.rel (0) target = $region25
    $region24: #{tpu_custom_call.1} parent=1 // pred_region
      %55 = dma.done [#allocation10], 6144
    $region25: #{tpu_custom_call.1} parent=1 // pred_fallthru
      _
    %56 = vst [vmem:[#allocation2] sm:$0xff] 0.0
    %57 = vst [vmem:[#allocation2 + $0x8] sm:$0xff] 0.0
    %58 = vst [vmem:[#allocation2 + $0x10] sm:$0xff] 0.0
    %59 = vst [vmem:[#allocation2 + $0x18] sm:$0xff] 0.0
    %60 = vst [vmem:[#allocation2 + $0x20] sm:$0xf] 0.0
    %61 = vst [vmem:[#allocation3] sm:$0xff] 0.0
    %62 = vst [vmem:[#allocation3 + $0x8] sm:$0xff] 0.0
    %63 = vst [vmem:[#allocation3 + $0x10] sm:$0xff] 0.0
    %64 = vst [vmem:[#allocation3 + $0x18] sm:$0xff] 0.0
    %65 = vst [vmem:[#allocation3 + $0x20] sm:$0xf] 0.0
    %v66 = vld [vmem:[#allocation6] sm:$0xff]
    %v67 = vld [vmem:[#allocation6 + $0x8] sm:$0xff]
    %vm68 = vcmask 130048
    %69 = vst.msk [vmem:[#allocation2 + $0x1] sm:$0xff] %vm68, %v66
    %70 = vst.msk [vmem:[#allocation2 + $0x9] sm:$0xff] %vm68, %v67
    %s71 = scalar_lea.vmem [#allocation6], 16
    %v72 = vld [vmem:[%s71] sm:$0xff]
    %v73 = vld [vmem:[%s71 + $0x8] sm:$0xff]
    %76 = vrot.lane.b32.xlu0 %v72, 16
    %v77 = vpop.permute.xlu0 %76
    %78 = vrot.lane.b32.xlu0 %v73, 16
    %v79 = vpop.permute.xlu0 %78
    %vm82 = vcmask 261248
    %83 = vst.msk [vmem:[#allocation2 + $0x1] sm:$0xff] %vm82, %v77
    %84 = vst.msk [vmem:[#allocation2 + $0x9] sm:$0xff] %vm82, %v79
    %s85 = scalar_lea.vmem [#allocation6], 32
    %v86 = vld [vmem:[%s85] sm:$0xff]
    %v87 = vld [vmem:[%s85 + $0x8] sm:$0xff]
    %90 = vrot.lane.b32.xlu0 %v86, 32
    %v91 = vpop.permute.xlu0 %90
    %92 = vrot.lane.b32.xlu0 %v87, 32
    %v93 = vpop.permute.xlu0 %92
    %vm96 = vcmask 392448
    %97 = vst.msk [vmem:[#allocation2 + $0x1] sm:$0xff] %vm96, %v91
    %98 = vst.msk [vmem:[#allocation2 + $0x9] sm:$0xff] %vm96, %v93
    %s99 = scalar_lea.vmem [#allocation6], 48
    %v100 = vld [vmem:[%s99] sm:$0xff]
    %v101 = vld [vmem:[%s99 + $0x8] sm:$0xff]
    %104 = vrot.lane.b32.xlu0 %v100, 48
    %v105 = vpop.permute.xlu0 %104
    %106 = vrot.lane.b32.xlu0 %v101, 48
    %v107 = vpop.permute.xlu0 %106
    %vm110 = vcmask 523648
    %111 = vst.msk [vmem:[#allocation2 + $0x1] sm:$0xff] %vm110, %v105
    %112 = vst.msk [vmem:[#allocation2 + $0x9] sm:$0xff] %vm110, %v107
    %s113 = scalar_lea.vmem [#allocation6], 64
    %v114 = vld [vmem:[%s113] sm:$0xff]
    %v115 = vld [vmem:[%s113 + $0x8] sm:$0xff]
    %116 = vst.msk [vmem:[#allocation2 + $0x13] sm:$0xff] %vm68, %v114
    %117 = vst.msk [vmem:[#allocation2 + $0x1b] sm:$0xff] %vm68, %v115
    %s118 = scalar_lea.vmem [#allocation6], 80
    %v119 = vld [vmem:[%s118] sm:$0xff]
    %v120 = vld [vmem:[%s118 + $0x8] sm:$0xff]
    %123 = vrot.lane.b32.xlu0 %v119, 16
    %v124 = vpop.permute.xlu0 %123
    %125 = vrot.lane.b32.xlu0 %v120, 16
    %v126 = vpop.permute.xlu0 %125
    %129 = vst.msk [vmem:[#allocation2 + $0x13] sm:$0xff] %vm82, %v124
    %130 = vst.msk [vmem:[#allocation2 + $0x1b] sm:$0xff] %vm82, %v126
    %s131 = scalar_lea.vmem [#allocation6], 96
    %v132 = vld [vmem:[%s131] sm:$0xff]
    %v133 = vld [vmem:[%s131 + $0x8] sm:$0xff]
    %136 = vrot.lane.b32.xlu0 %v132, 32
    %v137 = vpop.permute.xlu0 %136
    %138 = vrot.lane.b32.xlu0 %v133, 32
    %v139 = vpop.permute.xlu0 %138
    %142 = vst.msk [vmem:[#allocation2 + $0x13] sm:$0xff] %vm96, %v137
    %143 = vst.msk [vmem:[#allocation2 + $0x1b] sm:$0xff] %vm96, %v139
    %s144 = scalar_lea.vmem [#allocation6], 112
    %v145 = vld [vmem:[%s144] sm:$0xff]
    %v146 = vld [vmem:[%s144 + $0x8] sm:$0xff]
    %149 = vrot.lane.b32.xlu0 %v145, 48
    %v150 = vpop.permute.xlu0 %149
    %151 = vrot.lane.b32.xlu0 %v146, 48
    %v152 = vpop.permute.xlu0 %151
    %155 = vst.msk [vmem:[#allocation2 + $0x13] sm:$0xff] %vm110, %v150
    %156 = vst.msk [vmem:[#allocation2 + $0x1b] sm:$0xff] %vm110, %v152
    %v157 = vld [vmem:[#allocation2] sm:$0xff]
    %v158 = vld [vmem:[#allocation2 + $0x8] sm:$0xff]
    %v159 = vld [vmem:[#allocation2 + $0x10] sm:$0xff]
    %v160 = vld [vmem:[#allocation2 + $0x18] sm:$0xff]
    %v161 = vld [vmem:[#allocation2 + $0x20] sm:$0x3]
    %162 = vst [vmem:[#allocation4] sm:$0xff] %v157
    %163 = vst [vmem:[#allocation4 + $0x18] sm:$0xff] %v158
    %164 = vst [vmem:[#allocation4 + $0x30] sm:$0xff] %v159
    %165 = vst [vmem:[#allocation4 + $0x48] sm:$0xff] %v160
    %166 = vst [vmem:[#allocation4 + $0x60] sm:$0x3] %v161
    %v167 = vld [vmem:[#allocation2 + $0x1] sm:$0xff]
    %v168 = vld [vmem:[#allocation2 + $0x9] sm:$0xff]
    %v169 = vld [vmem:[#allocation2 + $0x11] sm:$0xff]
    %v170 = vld [vmem:[#allocation2 + $0x19] sm:$0xff]
    %v171 = vld [vmem:[#allocation2 + $0x21] sm:$0x3]
    %172 = vst [vmem:[#allocation4 + $0x8] sm:$0xff] %v167
    %173 = vst [vmem:[#allocation4 + $0x20] sm:$0xff] %v168
    %174 = vst [vmem:[#allocation4 + $0x38] sm:$0xff] %v169
    %175 = vst [vmem:[#allocation4 + $0x50] sm:$0xff] %v170
    %176 = vst [vmem:[#allocation4 + $0x68] sm:$0x3] %v171
    %v177 = vld [vmem:[#allocation2 + $0x2] sm:$0xff]
    %v178 = vld [vmem:[#allocation2 + $0xa] sm:$0xff]
    %v179 = vld [vmem:[#allocation2 + $0x12] sm:$0xff]
    %v180 = vld [vmem:[#allocation2 + $0x1a] sm:$0xff]
    %v181 = vld [vmem:[#allocation2 + $0x22] sm:$0x3]
    %182 = vst [vmem:[#allocation4 + $0x10] sm:$0xff] %v177
    %183 = vst [vmem:[#allocation4 + $0x28] sm:$0xff] %v178
    %184 = vst [vmem:[#allocation4 + $0x40] sm:$0xff] %v179
    %185 = vst [vmem:[#allocation4 + $0x58] sm:$0xff] %v180
    %186 = vst [vmem:[#allocation4 + $0x70] sm:$0x3] %v181
    %v187 = vld [vmem:[#allocation4] sm:$0xff]
    %v188 = vld [vmem:[#allocation4 + $0x8] sm:$0xff]
    %v189 = vld [vmem:[#allocation4 + $0x10] sm:$0xff]
    %v190 = vld [vmem:[#allocation4 + $0x18] sm:$0xff]
    %v191 = vld [vmem:[#allocation4 + $0x20] sm:$0xff]
    %v192 = vld [vmem:[#allocation4 + $0x28] sm:$0xff]
    %v193 = vld [vmem:[#allocation4 + $0x30] sm:$0xff]
    %v194 = vld [vmem:[#allocation4 + $0x38] sm:$0xff]
    %v195 = vld [vmem:[#allocation4 + $0x40] sm:$0xff]
    %v196 = vld [vmem:[#allocation4 + $0x48] sm:$0xff]
    %v197 = vld [vmem:[#allocation4 + $0x50] sm:$0xff]
    %v198 = vld [vmem:[#allocation4 + $0x58] sm:$0xff]
    %v199 = vld [vmem:[#allocation4 + $0x60] sm:$0x3]
    %v200 = vld [vmem:[#allocation4 + $0x68] sm:$0x3]
    %v201 = vld [vmem:[#allocation4 + $0x70] sm:$0x3]
    %v202 = vld [vmem:[#allocation9] sm:$0xff]
    %v203 = vld [vmem:[#allocation9 + $0x8] sm:$0xff]
    %v204 = vld [vmem:[#allocation9 + $0x10] sm:$0xff]
    %v205 = vld [vmem:[#allocation9 + $0x18] sm:$0xff]
    %v206 = vld [vmem:[#allocation9 + $0x20] sm:$0xff]
    %v207 = vld [vmem:[#allocation9 + $0x28] sm:$0xff]
    %v208 = vld [vmem:[#allocation9 + $0x30] sm:$0xff]
    %v209 = vld [vmem:[#allocation9 + $0x38] sm:$0xff]
    %v210 = vld [vmem:[#allocation9 + $0x40] sm:$0xff]
    %v211 = vld [vmem:[#allocation9 + $0x48] sm:$0xff]
    %v212 = vld [vmem:[#allocation9 + $0x50] sm:$0xff]
    %v213 = vld [vmem:[#allocation9 + $0x58] sm:$0xff]
    %v214 = vld [vmem:[#allocation9 + $0x60] sm:$0xff]
    %v215 = vld [vmem:[#allocation9 + $0x68] sm:$0xff]
    %v216 = vld [vmem:[#allocation9 + $0x70] sm:$0xff]
    %v217 = vld [vmem:[#allocation9 + $0x78] sm:$0xff]
    %v218 = vld [vmem:[#allocation9 + $0x80] sm:$0xff]
    %v219 = vld [vmem:[#allocation9 + $0x88] sm:$0xff]
    %v220 = vld [vmem:[#allocation9 + $0x90] sm:$0xff]
    %v221 = vld [vmem:[#allocation9 + $0x98] sm:$0xff]
    %v222 = vld [vmem:[#allocation9 + $0xa0] sm:$0xff]
    %v223 = vld [vmem:[#allocation9 + $0xa8] sm:$0xff]
    %v224 = vld [vmem:[#allocation9 + $0xb0] sm:$0xff]
    %v225 = vld [vmem:[#allocation9 + $0xb8] sm:$0xff]
    %v226 = vld [vmem:[#allocation9 + $0xc0] sm:$0xff]
    %v227 = vld [vmem:[#allocation9 + $0xc8] sm:$0xff]
    %v228 = vld [vmem:[#allocation9 + $0xd0] sm:$0xff]
    %v229 = vld [vmem:[#allocation9 + $0xd8] sm:$0xff]
    %v230 = vld [vmem:[#allocation9 + $0xe0] sm:$0xff]
    %v231 = vld [vmem:[#allocation9 + $0xe8] sm:$0xff]
    %v232 = vld [vmem:[#allocation9 + $0xf0] sm:$0xff]
    %v233 = vld [vmem:[#allocation9 + $0xf8] sm:$0xff]
    %v234 = vld [vmem:[#allocation9 + $0x100] sm:$0xff]
    %v235 = vld [vmem:[#allocation9 + $0x108] sm:$0xff]
    %v236 = vld [vmem:[#allocation9 + $0x110] sm:$0xff]
    %v237 = vld [vmem:[#allocation9 + $0x118] sm:$0xff]
    %v238 = vld [vmem:[#allocation9 + $0x120] sm:$0xff]
    %v239 = vld [vmem:[#allocation9 + $0x128] sm:$0xff]
    %v240 = vld [vmem:[#allocation9 + $0x130] sm:$0xff]
    %v241 = vld [vmem:[#allocation9 + $0x138] sm:$0xff]
    %v242 = vld [vmem:[#allocation9 + $0x140] sm:$0xff]
    %v243 = vld [vmem:[#allocation9 + $0x148] sm:$0xff]
    %v244 = vld [vmem:[#allocation9 + $0x150] sm:$0xff]
    %v245 = vld [vmem:[#allocation9 + $0x158] sm:$0xff]
    %v246 = vld [vmem:[#allocation9 + $0x160] sm:$0xff]
    %v247 = vld [vmem:[#allocation9 + $0x168] sm:$0xff]
    %v248 = vld [vmem:[#allocation9 + $0x170] sm:$0xff]
    %v249 = vld [vmem:[#allocation9 + $0x178] sm:$0xff]
    %250 = vmatprep.subr.mxu0 0.0
    %251 = vmatpush1.msra.mxu0 %v217
    %252 = vmatprep.subr.mxu0 0.0
    %253 = vmatpush1.msra.mxu0 %v216
    %254 = vmatprep.subr.mxu0 0.0
    %255 = vmatpush1.msra.mxu0 %v215
    %256 = vmatprep.subr.mxu0 0.0
    %257 = vmatpush1.msra.mxu0 %v214
    %258 = vmatprep.subr.mxu0 0.0
    %259 = vmatpush1.msra.mxu0 %v213
    %260 = vmatprep.subr.mxu0 0.0
    %261 = vmatpush1.msra.mxu0 %v212
    %262 = vmatprep.subr.mxu0 0.0
    %263 = vmatpush1.msra.mxu0 %v211
    %264 = vmatprep.subr.mxu0 0.0
    %265 = vmatpush1.msra.mxu0 %v210
    %266 = vmatprep.subr.mxu0 0.0
    %267 = vmatpush1.msra.mxu0 %v209
    %268 = vmatprep.subr.mxu0 0.0
    %269 = vmatpush1.msra.mxu0 %v208
    %270 = vmatprep.subr.mxu0 0.0
    %271 = vmatpush1.msra.mxu0 %v207
    %272 = vmatprep.subr.mxu0 0.0
    %273 = vmatpush1.msra.mxu0 %v206
    %274 = vmatprep.subr.mxu0 0.0
    %275 = vmatpush1.msra.mxu0 %v205
    %276 = vmatprep.subr.mxu0 0.0
    %277 = vmatpush1.msra.mxu0 %v204
    %278 = vmatprep.subr.mxu0 0.0
    %279 = vmatpush1.msra.mxu0 %v203
    %280 = vmatprep.subr.mxu0 0.0
    %281 = vmatpush1.msra.mxu0 %v202
    %282 = vmatprep.subr.mxu0 0.0
    %283 = vmatpush2.msra.mxu0 %v233
    %284 = vmatprep.subr.mxu0 0.0
    %285 = vmatpush2.msra.mxu0 %v232
    %286 = vmatprep.subr.mxu0 0.0
    %287 = vmatpush2.msra.mxu0 %v231
    %288 = vmatprep.subr.mxu0 0.0
    %289 = vmatpush2.msra.mxu0 %v230
    %290 = vmatprep.subr.mxu0 0.0
    %291 = vmatpush2.msra.mxu0 %v229
    %292 = vmatprep.subr.mxu0 0.0
    %293 = vmatpush2.msra.mxu0 %v228
    %294 = vmatprep.subr.mxu0 0.0
    %295 = vmatpush2.msra.mxu0 %v227
    %296 = vmatprep.subr.mxu0 0.0
    %297 = vmatpush2.msra.mxu0 %v226
    %298 = vmatprep.subr.mxu0 0.0
    %299 = vmatpush2.msra.mxu0 %v225
    %300 = vmatprep.subr.mxu0 0.0
    %301 = vmatpush2.msra.mxu0 %v224
    %302 = vmatprep.subr.mxu0 0.0
    %303 = vmatpush2.msra.mxu0 %v223
    %304 = vmatprep.subr.mxu0 0.0
    %305 = vmatpush2.msra.mxu0 %v222
    %306 = vmatprep.subr.mxu0 0.0
    %307 = vmatpush2.msra.mxu0 %v221
    %308 = vmatprep.subr.mxu0 0.0
    %309 = vmatpush2.msra.mxu0 %v220
    %310 = vmatprep.subr.mxu0 0.0
    %311 = vmatpush2.msra.mxu0 %v219
    %312 = vmatprep.subr.mxu0 0.0
    %313 = vmatpush2.msra.mxu0 %v218
    %314 = vmatprep.mubr.f32.mxu0 %v188
    %315 = vmatmul.mubr.f32.gmra.mxu0 %v187
    %v316 = vpop.f32.mrf.mxu0
    %v317 = vadd.f32 0.0, %v316
    %v318 = vpop.f32.mrf.mxu0
    %319 = vmatprep.mubr.f32.mxu0 %v191
    %320 = vmatmul.mubr.f32.gmra.mxu0 %v190
    %v321 = vpop.f32.mrf.mxu0
    %v322 = vadd.f32 0.0, %v321
    %v323 = vpop.f32.mrf.mxu0
    %324 = vmatprep.mubr.f32.mxu0 %v194
    %325 = vmatmul.mubr.f32.gmra.mxu0 %v193
    %v326 = vpop.f32.mrf.mxu0
    %v327 = vadd.f32 0.0, %v326
    %v328 = vpop.f32.mrf.mxu0
    %329 = vmatprep.mubr.f32.mxu0 %v197
    %330 = vmatmul.mubr.f32.gmra.mxu0 %v196
    %v331 = vpop.f32.mrf.mxu0
    %v332 = vadd.f32 0.0, %v331
    %v333 = vpop.f32.mrf.mxu0
    %334 = vmatprep.mubr.f32.mxu0 %v200
    %335 = vmatmul.mubr.f32.gmra.mxu0 %v199
    %v336 = vpop.f32.mrf.mxu0
    %v337 = vadd.f32 0.0, %v336
    %v338 = vpop.f32.mrf.mxu0
    %339 = vdwg.mxu0
    %340 = vmatprep.subr.mxu0 0.0
    %341 = vmatpush1.msra.mxu0 %v249
    %342 = vmatprep.subr.mxu0 0.0
    %343 = vmatpush1.msra.mxu0 %v248
    %344 = vmatprep.subr.mxu0 0.0
    %345 = vmatpush1.msra.mxu0 %v247
    %346 = vmatprep.subr.mxu0 0.0
    %347 = vmatpush1.msra.mxu0 %v246
    %348 = vmatprep.subr.mxu0 0.0
    %349 = vmatpush1.msra.mxu0 %v245
    %350 = vmatprep.subr.mxu0 0.0
    %351 = vmatpush1.msra.mxu0 %v244
    %352 = vmatprep.subr.mxu0 0.0
    %353 = vmatpush1.msra.mxu0 %v243
    %354 = vmatprep.subr.mxu0 0.0
    %355 = vmatpush1.msra.mxu0 %v242
    %356 = vmatprep.subr.mxu0 0.0
    %357 = vmatpush1.msra.mxu0 %v241
    %358 = vmatprep.subr.mxu0 0.0
    %359 = vmatpush1.msra.mxu0 %v240
    %360 = vmatprep.subr.mxu0 0.0
    %361 = vmatpush1.msra.mxu0 %v239
    %362 = vmatprep.subr.mxu0 0.0
    %363 = vmatpush1.msra.mxu0 %v238
    %364 = vmatprep.subr.mxu0 0.0
    %365 = vmatpush1.msra.mxu0 %v237
    %366 = vmatprep.subr.mxu0 0.0
    %367 = vmatpush1.msra.mxu0 %v236
    %368 = vmatprep.subr.mxu0 0.0
    %369 = vmatpush1.msra.mxu0 %v235
    %370 = vmatprep.subr.mxu0 0.0
    %371 = vmatpush1.msra.mxu0 %v234
    %372 = vmatprep.subr.mxu0 0.0
    %373 = vmatpush2.msra.mxu0 0.0
    %374 = vmatprep.subr.mxu0 0.0
    %375 = vmatpush2.msra.mxu0 0.0
    %376 = vmatprep.subr.mxu0 0.0
    %377 = vmatpush2.msra.mxu0 0.0
    %378 = vmatprep.subr.mxu0 0.0
    %379 = vmatpush2.msra.mxu0 0.0
    %380 = vmatprep.subr.mxu0 0.0
    %381 = vmatpush2.msra.mxu0 0.0
    %382 = vmatprep.subr.mxu0 0.0
    %383 = vmatpush2.msra.mxu0 0.0
    %384 = vmatprep.subr.mxu0 0.0
    %385 = vmatpush2.msra.mxu0 0.0
    %386 = vmatprep.subr.mxu0 0.0
    %387 = vmatpush2.msra.mxu0 0.0
    %388 = vmatprep.subr.mxu0 0.0
    %389 = vmatpush2.msra.mxu0 0.0
    %390 = vmatprep.subr.mxu0 0.0
    %391 = vmatpush2.msra.mxu0 0.0
    %392 = vmatprep.subr.mxu0 0.0
    %393 = vmatpush2.msra.mxu0 0.0
    %394 = vmatprep.subr.mxu0 0.0
    %395 = vmatpush2.msra.mxu0 0.0
    %396 = vmatprep.subr.mxu0 0.0
    %397 = vmatpush2.msra.mxu0 0.0
    %398 = vmatprep.subr.mxu0 0.0
    %399 = vmatpush2.msra.mxu0 0.0
    %400 = vmatprep.subr.mxu0 0.0
    %401 = vmatpush2.msra.mxu0 0.0
    %402 = vmatprep.subr.mxu0 0.0
    %403 = vmatpush2.msra.mxu0 0.0
    %404 = vmatprep.mubr.f32.mxu0 0.0
    %405 = vmatmul.mubr.f32.gmra.mxu0 %v189
    %v406 = vpop.f32.mrf.mxu0
    %v407 = vadd.f32 %v317, %v406
    %v408 = vpop.f32.mrf.mxu0
    %409 = vmatprep.mubr.f32.mxu0 0.0
    %410 = vmatmul.mubr.f32.gmra.mxu0 %v192
    %v411 = vpop.f32.mrf.mxu0
    %v412 = vadd.f32 %v322, %v411
    %v413 = vpop.f32.mrf.mxu0
    %414 = vmatprep.mubr.f32.mxu0 0.0
    %415 = vmatmul.mubr.f32.gmra.mxu0 %v195
    %v416 = vpop.f32.mrf.mxu0
    %v417 = vadd.f32 %v327, %v416
    %v418 = vpop.f32.mrf.mxu0
    %419 = vmatprep.mubr.f32.mxu0 0.0
    %420 = vmatmul.mubr.f32.gmra.mxu0 %v198
    %v421 = vpop.f32.mrf.mxu0
    %v422 = vadd.f32 %v332, %v421
    %v423 = vpop.f32.mrf.mxu0
    %424 = vmatprep.mubr.f32.mxu0 0.0
    %425 = vmatmul.mubr.f32.gmra.mxu0 %v201
    %v426 = vpop.f32.mrf.mxu0
    %v427 = vadd.f32 %v337, %v426
    %v428 = vpop.f32.mrf.mxu0
    %429 = vdwg.mxu0
    %v430 = vmax.f32 %v407, 0.0
    %v431 = vmax.f32 %v412, 0.0
    %v432 = vmax.f32 %v417, 0.0
    %v433 = vmax.f32 %v422, 0.0
    %v434 = vmax.f32 %v427, 0.0
    %435 = vst [vmem:[#allocation3 + $0x1] sm:$0xff] %v430
    %436 = vst [vmem:[#allocation3 + $0x9] sm:$0xff] %v431
    %437 = vst [vmem:[#allocation3 + $0x11] sm:$0xfc] %v432
    %438 = vst [vmem:[#allocation3 + $0x19] sm:$0xff] %v433
    %439 = vst [vmem:[#allocation3 + $0x21] sm:$0x3] %v434
    %v440 = vld [vmem:[#allocation3] sm:$0xff]
    %v441 = vld [vmem:[#allocation3 + $0x8] sm:$0xff]
    %v442 = vld [vmem:[#allocation3 + $0x10] sm:$0xff]
    %v443 = vld [vmem:[#allocation3 + $0x18] sm:$0xff]
    %v444 = vld [vmem:[#allocation3 + $0x20] sm:$0x3]
    %445 = vst [vmem:[#allocation5] sm:$0xff] %v440
    %446 = vst [vmem:[#allocation5 + $0x18] sm:$0xff] %v441
    %447 = vst [vmem:[#allocation5 + $0x30] sm:$0xff] %v442
    %448 = vst [vmem:[#allocation5 + $0x48] sm:$0xff] %v443
    %449 = vst [vmem:[#allocation5 + $0x60] sm:$0x3] %v444
    %v450 = vld [vmem:[#allocation3 + $0x1] sm:$0xff]
    %v451 = vld [vmem:[#allocation3 + $0x9] sm:$0xff]
    %v452 = vld [vmem:[#allocation3 + $0x11] sm:$0xff]
    %v453 = vld [vmem:[#allocation3 + $0x19] sm:$0xff]
    %v454 = vld [vmem:[#allocation3 + $0x21] sm:$0x3]
    %455 = vst [vmem:[#allocation5 + $0x8] sm:$0xff] %v450
    %456 = vst [vmem:[#allocation5 + $0x20] sm:$0xff] %v451
    %457 = vst [vmem:[#allocation5 + $0x38] sm:$0xff] %v452
    %458 = vst [vmem:[#allocation5 + $0x50] sm:$0xff] %v453
    %459 = vst [vmem:[#allocation5 + $0x68] sm:$0x3] %v454
    %v460 = vld [vmem:[#allocation3 + $0x2] sm:$0xff]
    %v461 = vld [vmem:[#allocation3 + $0xa] sm:$0xff]
    %v462 = vld [vmem:[#allocation3 + $0x12] sm:$0xff]
    %v463 = vld [vmem:[#allocation3 + $0x1a] sm:$0xff]
    %v464 = vld [vmem:[#allocation3 + $0x22] sm:$0x3]
    %465 = vst [vmem:[#allocation5 + $0x10] sm:$0xff] %v460
    %466 = vst [vmem:[#allocation5 + $0x28] sm:$0xff] %v461
    %467 = vst [vmem:[#allocation5 + $0x40] sm:$0xff] %v462
    %468 = vst [vmem:[#allocation5 + $0x58] sm:$0xff] %v463
    %469 = vst [vmem:[#allocation5 + $0x70] sm:$0x3] %v464
    %v470 = vld [vmem:[#allocation5] sm:$0xff]
    %v471 = vld [vmem:[#allocation5 + $0x8] sm:$0xff]
    %v472 = vld [vmem:[#allocation5 + $0x10] sm:$0xff]
    %v473 = vld [vmem:[#allocation5 + $0x18] sm:$0xff]
    %v474 = vld [vmem:[#allocation5 + $0x20] sm:$0xff]
    %v475 = vld [vmem:[#allocation5 + $0x28] sm:$0xff]
    %v476 = vld [vmem:[#allocation5 + $0x30] sm:$0xff]
    %v477 = vld [vmem:[#allocation5 + $0x38] sm:$0xff]
    %v478 = vld [vmem:[#allocation5 + $0x40] sm:$0xff]
    %v479 = vld [vmem:[#allocation5 + $0x48] sm:$0xff]
    %v480 = vld [vmem:[#allocation5 + $0x50] sm:$0xff]
    %v481 = vld [vmem:[#allocation5 + $0x58] sm:$0xff]
    %v482 = vld [vmem:[#allocation5 + $0x60] sm:$0x3]
    %v483 = vld [vmem:[#allocation5 + $0x68] sm:$0x3]
    %v484 = vld [vmem:[#allocation5 + $0x70] sm:$0x3]
    %v485 = vld [vmem:[#allocation11] sm:$0xff]
    %v486 = vld [vmem:[#allocation11 + $0x8] sm:$0xff]
    %v487 = vld [vmem:[#allocation11 + $0x10] sm:$0xff]
    %v488 = vld [vmem:[#allocation11 + $0x18] sm:$0xff]
    %v489 = vld [vmem:[#allocation11 + $0x20] sm:$0xff]
    %v490 = vld [vmem:[#allocation11 + $0x28] sm:$0xff]
    %v491 = vld [vmem:[#allocation11 + $0x30] sm:$0xff]
    %v492 = vld [vmem:[#allocation11 + $0x38] sm:$0xff]
    %v493 = vld [vmem:[#allocation11 + $0x40] sm:$0xff]
    %v494 = vld [vmem:[#allocation11 + $0x48] sm:$0xff]
    %v495 = vld [vmem:[#allocation11 + $0x50] sm:$0xff]
    %v496 = vld [vmem:[#allocation11 + $0x58] sm:$0xff]
    %v497 = vld [vmem:[#allocation11 + $0x60] sm:$0xff]
    %v498 = vld [vmem:[#allocation11 + $0x68] sm:$0xff]
    %v499 = vld [vmem:[#allocation11 + $0x70] sm:$0xff]
    %v500 = vld [vmem:[#allocation11 + $0x78] sm:$0xff]
    %v501 = vld [vmem:[#allocation11 + $0x80] sm:$0xff]
    %v502 = vld [vmem:[#allocation11 + $0x88] sm:$0xff]
    %v503 = vld [vmem:[#allocation11 + $0x90] sm:$0xff]
    %v504 = vld [vmem:[#allocation11 + $0x98] sm:$0xff]
    %v505 = vld [vmem:[#allocation11 + $0xa0] sm:$0xff]
    %v506 = vld [vmem:[#allocation11 + $0xa8] sm:$0xff]
    %v507 = vld [vmem:[#allocation11 + $0xb0] sm:$0xff]
    %v508 = vld [vmem:[#allocation11 + $0xb8] sm:$0xff]
    %v509 = vld [vmem:[#allocation11 + $0xc0] sm:$0xff]
    %v510 = vld [vmem:[#allocation11 + $0xc8] sm:$0xff]
    %v511 = vld [vmem:[#allocation11 + $0xd0] sm:$0xff]
    %v512 = vld [vmem:[#allocation11 + $0xd8] sm:$0xff]
    %v513 = vld [vmem:[#allocation11 + $0xe0] sm:$0xff]
    %v514 = vld [vmem:[#allocation11 + $0xe8] sm:$0xff]
    %v515 = vld [vmem:[#allocation11 + $0xf0] sm:$0xff]
    %v516 = vld [vmem:[#allocation11 + $0xf8] sm:$0xff]
    %v517 = vld [vmem:[#allocation11 + $0x100] sm:$0xff]
    %v518 = vld [vmem:[#allocation11 + $0x108] sm:$0xff]
    %v519 = vld [vmem:[#allocation11 + $0x110] sm:$0xff]
    %v520 = vld [vmem:[#allocation11 + $0x118] sm:$0xff]
    %v521 = vld [vmem:[#allocation11 + $0x120] sm:$0xff]
    %v522 = vld [vmem:[#allocation11 + $0x128] sm:$0xff]
    %v523 = vld [vmem:[#allocation11 + $0x130] sm:$0xff]
    %v524 = vld [vmem:[#allocation11 + $0x138] sm:$0xff]
    %v525 = vld [vmem:[#allocation11 + $0x140] sm:$0xff]
    %v526 = vld [vmem:[#allocation11 + $0x148] sm:$0xff]
    %v527 = vld [vmem:[#allocation11 + $0x150] sm:$0xff]
    %v528 = vld [vmem:[#allocation11 + $0x158] sm:$0xff]
    %v529 = vld [vmem:[#allocation11 + $0x160] sm:$0xff]
    %v530 = vld [vmem:[#allocation11 + $0x168] sm:$0xff]
    %v531 = vld [vmem:[#allocation11 + $0x170] sm:$0xff]
    %v532 = vld [vmem:[#allocation11 + $0x178] sm:$0xff]
    %533 = vmatprep.subr.mxu0 0.0
    %534 = vmatpush1.msra.mxu0 %v500
    %535 = vmatprep.subr.mxu0 0.0
    %536 = vmatpush1.msra.mxu0 %v499
    %537 = vmatprep.subr.mxu0 0.0
    %538 = vmatpush1.msra.mxu0 %v498
    %539 = vmatprep.subr.mxu0 0.0
    %540 = vmatpush1.msra.mxu0 %v497
    %541 = vmatprep.subr.mxu0 0.0
    %542 = vmatpush1.msra.mxu0 %v496
    %543 = vmatprep.subr.mxu0 0.0
    %544 = vmatpush1.msra.mxu0 %v495
    %545 = vmatprep.subr.mxu0 0.0
    %546 = vmatpush1.msra.mxu0 %v494
    %547 = vmatprep.subr.mxu0 0.0
    %548 = vmatpush1.msra.mxu0 %v493
    %549 = vmatprep.subr.mxu0 0.0
    %550 = vmatpush1.msra.mxu0 %v492
    %551 = vmatprep.subr.mxu0 0.0
    %552 = vmatpush1.msra.mxu0 %v491
    %553 = vmatprep.subr.mxu0 0.0
    %554 = vmatpush1.msra.mxu0 %v490
    %555 = vmatprep.subr.mxu0 0.0
    %556 = vmatpush1.msra.mxu0 %v489
    %557 = vmatprep.subr.mxu0 0.0
    %558 = vmatpush1.msra.mxu0 %v488
    %559 = vmatprep.subr.mxu0 0.0
    %560 = vmatpush1.msra.mxu0 %v487
    %561 = vmatprep.subr.mxu0 0.0
    %562 = vmatpush1.msra.mxu0 %v486
    %563 = vmatprep.subr.mxu0 0.0
    %564 = vmatpush1.msra.mxu0 %v485
    %565 = vmatprep.subr.mxu0 0.0
    %566 = vmatpush2.msra.mxu0 %v516
    %567 = vmatprep.subr.mxu0 0.0
    %568 = vmatpush2.msra.mxu0 %v515
    %569 = vmatprep.subr.mxu0 0.0
    %570 = vmatpush2.msra.mxu0 %v514
    %571 = vmatprep.subr.mxu0 0.0
    %572 = vmatpush2.msra.mxu0 %v513
    %573 = vmatprep.subr.mxu0 0.0
    %574 = vmatpush2.msra.mxu0 %v512
    %575 = vmatprep.subr.mxu0 0.0
    %576 = vmatpush2.msra.mxu0 %v511
    %577 = vmatprep.subr.mxu0 0.0
    %578 = vmatpush2.msra.mxu0 %v510
    %579 = vmatprep.subr.mxu0 0.0
    %580 = vmatpush2.msra.mxu0 %v509
    %581 = vmatprep.subr.mxu0 0.0
    %582 = vmatpush2.msra.mxu0 %v508
    %583 = vmatprep.subr.mxu0 0.0
    %584 = vmatpush2.msra.mxu0 %v507
    %585 = vmatprep.subr.mxu0 0.0
    %586 = vmatpush2.msra.mxu0 %v506
    %587 = vmatprep.subr.mxu0 0.0
    %588 = vmatpush2.msra.mxu0 %v505
    %589 = vmatprep.subr.mxu0 0.0
    %590 = vmatpush2.msra.mxu0 %v504
    %591 = vmatprep.subr.mxu0 0.0
    %592 = vmatpush2.msra.mxu0 %v503
    %593 = vmatprep.subr.mxu0 0.0
    %594 = vmatpush2.msra.mxu0 %v502
    %595 = vmatprep.subr.mxu0 0.0
    %596 = vmatpush2.msra.mxu0 %v501
    %597 = vmatprep.mubr.f32.mxu0 %v471
    %598 = vmatmul.mubr.f32.gmra.mxu0 %v470
    %v599 = vpop.f32.mrf.mxu0
    %v600 = vadd.f32 0.0, %v599
    %v601 = vpop.f32.mrf.mxu0
    %602 = vmatprep.mubr.f32.mxu0 %v474
    %603 = vmatmul.mubr.f32.gmra.mxu0 %v473
    %v604 = vpop.f32.mrf.mxu0
    %v605 = vadd.f32 0.0, %v604
    %v606 = vpop.f32.mrf.mxu0
    %607 = vmatprep.mubr.f32.mxu0 %v477
    %608 = vmatmul.mubr.f32.gmra.mxu0 %v476
    %v609 = vpop.f32.mrf.mxu0
    %v610 = vadd.f32 0.0, %v609
    %v611 = vpop.f32.mrf.mxu0
    %612 = vmatprep.mubr.f32.mxu0 %v480
    %613 = vmatmul.mubr.f32.gmra.mxu0 %v479
    %v614 = vpop.f32.mrf.mxu0
    %v615 = vadd.f32 0.0, %v614
    %v616 = vpop.f32.mrf.mxu0
    %617 = vmatprep.mubr.f32.mxu0 %v483
    %618 = vmatmul.mubr.f32.gmra.mxu0 %v482
    %v619 = vpop.f32.mrf.mxu0
    %v620 = vadd.f32 0.0, %v619
    %v621 = vpop.f32.mrf.mxu0
    %622 = vdwg.mxu0
    %623 = vmatprep.subr.mxu0 0.0
    %624 = vmatpush1.msra.mxu0 %v532
    %625 = vmatprep.subr.mxu0 0.0
    %626 = vmatpush1.msra.mxu0 %v531
    %627 = vmatprep.subr.mxu0 0.0
    %628 = vmatpush1.msra.mxu0 %v530
    %629 = vmatprep.subr.mxu0 0.0
    %630 = vmatpush1.msra.mxu0 %v529
    %631 = vmatprep.subr.mxu0 0.0
    %632 = vmatpush1.msra.mxu0 %v528
    %633 = vmatprep.subr.mxu0 0.0
    %634 = vmatpush1.msra.mxu0 %v527
    %635 = vmatprep.subr.mxu0 0.0
    %636 = vmatpush1.msra.mxu0 %v526
    %637 = vmatprep.subr.mxu0 0.0
    %638 = vmatpush1.msra.mxu0 %v525
    %639 = vmatprep.subr.mxu0 0.0
    %640 = vmatpush1.msra.mxu0 %v524
    %641 = vmatprep.subr.mxu0 0.0
    %642 = vmatpush1.msra.mxu0 %v523
    %643 = vmatprep.subr.mxu0 0.0
    %644 = vmatpush1.msra.mxu0 %v522
    %645 = vmatprep.subr.mxu0 0.0
    %646 = vmatpush1.msra.mxu0 %v521
    %647 = vmatprep.subr.mxu0 0.0
    %648 = vmatpush1.msra.mxu0 %v520
    %649 = vmatprep.subr.mxu0 0.0
    %650 = vmatpush1.msra.mxu0 %v519
    %651 = vmatprep.subr.mxu0 0.0
    %652 = vmatpush1.msra.mxu0 %v518
    %653 = vmatprep.subr.mxu0 0.0
    %654 = vmatpush1.msra.mxu0 %v517
    %655 = vmatprep.subr.mxu0 0.0
    %656 = vmatpush2.msra.mxu0 0.0
    %657 = vmatprep.subr.mxu0 0.0
    %658 = vmatpush2.msra.mxu0 0.0
    %659 = vmatprep.subr.mxu0 0.0
    %660 = vmatpush2.msra.mxu0 0.0
    %661 = vmatprep.subr.mxu0 0.0
    %662 = vmatpush2.msra.mxu0 0.0
    %663 = vmatprep.subr.mxu0 0.0
    %664 = vmatpush2.msra.mxu0 0.0
    %665 = vmatprep.subr.mxu0 0.0
    %666 = vmatpush2.msra.mxu0 0.0
    %667 = vmatprep.subr.mxu0 0.0
    %668 = vmatpush2.msra.mxu0 0.0
    %669 = vmatprep.subr.mxu0 0.0
    %670 = vmatpush2.msra.mxu0 0.0
    %671 = vmatprep.subr.mxu0 0.0
    %672 = vmatpush2.msra.mxu0 0.0
    %673 = vmatprep.subr.mxu0 0.0
    %674 = vmatpush2.msra.mxu0 0.0
    %675 = vmatprep.subr.mxu0 0.0
    %676 = vmatpush2.msra.mxu0 0.0
    %677 = vmatprep.subr.mxu0 0.0
    %678 = vmatpush2.msra.mxu0 0.0
    %679 = vmatprep.subr.mxu0 0.0
    %680 = vmatpush2.msra.mxu0 0.0
    %681 = vmatprep.subr.mxu0 0.0
    %682 = vmatpush2.msra.mxu0 0.0
    %683 = vmatprep.subr.mxu0 0.0
    %684 = vmatpush2.msra.mxu0 0.0
    %685 = vmatprep.subr.mxu0 0.0
    %686 = vmatpush2.msra.mxu0 0.0
    %687 = vmatprep.mubr.f32.mxu0 0.0
    %688 = vmatmul.mubr.f32.gmra.mxu0 %v472
    %v689 = vpop.f32.mrf.mxu0
    %v690 = vadd.f32 %v600, %v689
    %v691 = vpop.f32.mrf.mxu0
    %692 = vmatprep.mubr.f32.mxu0 0.0
    %693 = vmatmul.mubr.f32.gmra.mxu0 %v475
    %v694 = vpop.f32.mrf.mxu0
    %v695 = vadd.f32 %v605, %v694
    %v696 = vpop.f32.mrf.mxu0
    %697 = vmatprep.mubr.f32.mxu0 0.0
    %698 = vmatmul.mubr.f32.gmra.mxu0 %v478
    %v699 = vpop.f32.mrf.mxu0
    %v700 = vadd.f32 %v610, %v699
    %v701 = vpop.f32.mrf.mxu0
    %702 = vmatprep.mubr.f32.mxu0 0.0
    %703 = vmatmul.mubr.f32.gmra.mxu0 %v481
    %v704 = vpop.f32.mrf.mxu0
    %v705 = vadd.f32 %v615, %v704
    %v706 = vpop.f32.mrf.mxu0
    %707 = vmatprep.mubr.f32.mxu0 0.0
    %708 = vmatmul.mubr.f32.gmra.mxu0 %v484
    %v709 = vpop.f32.mrf.mxu0
    %v710 = vadd.f32 %v620, %v709
    %v711 = vpop.f32.mrf.mxu0
    %712 = vdwg.mxu0
    %v713 = vmax.f32 %v690, 0.0
    %v714 = vmax.f32 %v695, 0.0
    %v715 = vmax.f32 %v700, 0.0
    %v716 = vmax.f32 %v705, 0.0
    %v717 = vmax.f32 %v710, 0.0
    %718 = vst.msk [vmem:[#allocation12] sm:$0xff] %vm68, %v713
    %719 = vst.msk [vmem:[#allocation12 + $0x8] sm:$0xff] %vm68, %v714
    %722 = vrot.lane.b32.xlu0 %v713, 112
    %v723 = vpop.permute.xlu0 %722
    %724 = vrot.lane.b32.xlu0 %v714, 112
    %v725 = vpop.permute.xlu0 %724
    %s728 = scalar_lea.vmem [#allocation12], 16
    %729 = vst.msk [vmem:[%s728] sm:$0xff] %vm68, %v723
    %730 = vst.msk [vmem:[%s728 + $0x8] sm:$0xff] %vm68, %v725
    %731 = vrot.lane.b32.xlu0 %v713, 96
    %v732 = vpop.permute.xlu0 %731
    %733 = vrot.lane.b32.xlu0 %v714, 96
    %v734 = vpop.permute.xlu0 %733
    %s737 = scalar_lea.vmem [#allocation12], 32
    %738 = vst.msk [vmem:[%s737] sm:$0xff] %vm68, %v732
    %739 = vst.msk [vmem:[%s737 + $0x8] sm:$0xff] %vm68, %v734
    %740 = vrot.lane.b32.xlu0 %v713, 80
    %v741 = vpop.permute.xlu0 %740
    %742 = vrot.lane.b32.xlu0 %v714, 80
    %v743 = vpop.permute.xlu0 %742
    %s746 = scalar_lea.vmem [#allocation12], 48
    %747 = vst.msk [vmem:[%s746] sm:$0xff] %vm68, %v741
    %748 = vst.msk [vmem:[%s746 + $0x8] sm:$0xff] %vm68, %v743
    %749 = vrot.lane.b32.xlu0 %v713, 64
    %v750 = vpop.permute.xlu0 %749
    %751 = vrot.lane.b32.xlu0 %v714, 64
    %v752 = vpop.permute.xlu0 %751
    %s755 = scalar_lea.vmem [#allocation12], 64
    %756 = vst.msk [vmem:[%s755] sm:$0xff] %vm68, %v750
    %757 = vst.msk [vmem:[%s755 + $0x8] sm:$0xff] %vm68, %v752
    %758 = vrot.lane.b32.xlu0 %v713, 48
    %v759 = vpop.permute.xlu0 %758
    %760 = vrot.lane.b32.xlu0 %v714, 48
    %v761 = vpop.permute.xlu0 %760
    %s764 = scalar_lea.vmem [#allocation12], 80
    %765 = vst.msk [vmem:[%s764] sm:$0xff] %vm68, %v759
    %766 = vst.msk [vmem:[%s764 + $0x8] sm:$0xff] %vm68, %v761
    %767 = vrot.lane.b32.xlu0 %v713, 32
    %v768 = vpop.permute.xlu0 %767
    %769 = vrot.lane.b32.xlu0 %v714, 32
    %v770 = vpop.permute.xlu0 %769
    %s773 = scalar_lea.vmem [#allocation12], 96
    %774 = vst.msk [vmem:[%s773] sm:$0xff] %vm68, %v768
    %775 = vst.msk [vmem:[%s773 + $0x8] sm:$0xff] %vm68, %v770
    %776 = vrot.lane.b32.xlu0 %v713, 16
    %v777 = vpop.permute.xlu0 %776
    %778 = vrot.lane.b32.xlu0 %v714, 16
    %v779 = vpop.permute.xlu0 %778
    %s782 = scalar_lea.vmem [#allocation12], 112
    %783 = vst.msk [vmem:[%s782] sm:$0xff] %vm68, %v777
    %784 = vst.msk [vmem:[%s782 + $0x8] sm:$0xff] %vm68, %v779
    %s785 = scalar_lea.vmem [#allocation12], 128
    %vm786 = vcmask 130050
    %787 = vst.msk [vmem:[%s785 - $0x2] sm:$0xfc] %vm786, %v715
    %788 = vst.msk [vmem:[%s785 + $0x6] sm:$0xff] %vm68, %v716
    %vm789 = vcmask 123904
    %790 = vst.msk [vmem:[%s785 + $0xe] sm:$0x3] %vm789, %v717
    %794 = vrot.lane.b32.xlu0 %v715, 112
    %v795 = vpop.permute.xlu0 %794
    %796 = vrot.lane.b32.xlu0 %v716, 112
    %v797 = vpop.permute.xlu0 %796
    %798 = vrot.lane.b32.xlu0 %v717, 112
    %v799 = vpop.permute.xlu0 %798
    %s803 = scalar_lea.vmem [#allocation12], 144
    %804 = vst.msk [vmem:[%s803 - $0x2] sm:$0xfc] %vm786, %v795
    %805 = vst.msk [vmem:[%s803 + $0x6] sm:$0xff] %vm68, %v797
    %806 = vst.msk [vmem:[%s803 + $0xe] sm:$0x3] %vm789, %v799
    %807 = vrot.lane.b32.xlu0 %v715, 96
    %v808 = vpop.permute.xlu0 %807
    %809 = vrot.lane.b32.xlu0 %v716, 96
    %v810 = vpop.permute.xlu0 %809
    %811 = vrot.lane.b32.xlu0 %v717, 96
    %v812 = vpop.permute.xlu0 %811
    %s816 = scalar_lea.vmem [#allocation12], 160
    %817 = vst.msk [vmem:[%s816 - $0x2] sm:$0xfc] %vm786, %v808
    %818 = vst.msk [vmem:[%s816 + $0x6] sm:$0xff] %vm68, %v810
    %819 = vst.msk [vmem:[%s816 + $0xe] sm:$0x3] %vm789, %v812
    %820 = vrot.lane.b32.xlu0 %v715, 80
    %v821 = vpop.permute.xlu0 %820
    %822 = vrot.lane.b32.xlu0 %v716, 80
    %v823 = vpop.permute.xlu0 %822
    %824 = vrot.lane.b32.xlu0 %v717, 80
    %v825 = vpop.permute.xlu0 %824
    %s829 = scalar_lea.vmem [#allocation12], 176
    %830 = vst.msk [vmem:[%s829 - $0x2] sm:$0xfc] %vm786, %v821
    %831 = vst.msk [vmem:[%s829 + $0x6] sm:$0xff] %vm68, %v823
    %832 = vst.msk [vmem:[%s829 + $0xe] sm:$0x3] %vm789, %v825
    %833 = vrot.lane.b32.xlu0 %v715, 64
    %v834 = vpop.permute.xlu0 %833
    %835 = vrot.lane.b32.xlu0 %v716, 64
    %v836 = vpop.permute.xlu0 %835
    %837 = vrot.lane.b32.xlu0 %v717, 64
    %v838 = vpop.permute.xlu0 %837
    %s842 = scalar_lea.vmem [#allocation12], 192
    %843 = vst.msk [vmem:[%s842 - $0x2] sm:$0xfc] %vm786, %v834
    %844 = vst.msk [vmem:[%s842 + $0x6] sm:$0xff] %vm68, %v836
    %845 = vst.msk [vmem:[%s842 + $0xe] sm:$0x3] %vm789, %v838
    %846 = vrot.lane.b32.xlu0 %v715, 48
    %v847 = vpop.permute.xlu0 %846
    %848 = vrot.lane.b32.xlu0 %v716, 48
    %v849 = vpop.permute.xlu0 %848
    %850 = vrot.lane.b32.xlu0 %v717, 48
    %v851 = vpop.permute.xlu0 %850
    %s855 = scalar_lea.vmem [#allocation12], 208
    %856 = vst.msk [vmem:[%s855 - $0x2] sm:$0xfc] %vm786, %v847
    %857 = vst.msk [vmem:[%s855 + $0x6] sm:$0xff] %vm68, %v849
    %858 = vst.msk [vmem:[%s855 + $0xe] sm:$0x3] %vm789, %v851
    %859 = vrot.lane.b32.xlu0 %v715, 32
    %v860 = vpop.permute.xlu0 %859
    %861 = vrot.lane.b32.xlu0 %v716, 32
    %v862 = vpop.permute.xlu0 %861
    %863 = vrot.lane.b32.xlu0 %v717, 32
    %v864 = vpop.permute.xlu0 %863
    %s868 = scalar_lea.vmem [#allocation12], 224
    %869 = vst.msk [vmem:[%s868 - $0x2] sm:$0xfc] %vm786, %v860
    %870 = vst.msk [vmem:[%s868 + $0x6] sm:$0xff] %vm68, %v862
    %871 = vst.msk [vmem:[%s868 + $0xe] sm:$0x3] %vm789, %v864
    %872 = vrot.lane.b32.xlu0 %v715, 16
    %v873 = vpop.permute.xlu0 %872
    %874 = vrot.lane.b32.xlu0 %v716, 16
    %v875 = vpop.permute.xlu0 %874
    %876 = vrot.lane.b32.xlu0 %v717, 16
    %v877 = vpop.permute.xlu0 %876
    %s881 = scalar_lea.vmem [#allocation12], 240
    %882 = vst.msk [vmem:[%s881 - $0x2] sm:$0xfc] %vm786, %v873
    %883 = vst.msk [vmem:[%s881 + $0x6] sm:$0xff] %vm68, %v875
    %884 = vst.msk [vmem:[%s881 + $0xe] sm:$0x3] %vm789, %v877
    // Predicated region
    $region26: #{tpu_custom_call.1} parent=1 // pred_check
      _
    $region27: #{tpu_custom_call.1} parent=1 // pred_check_branch
      %886 = sbr.rel (0) target = $region29
    $region28: #{tpu_custom_call.1} parent=1 // pred_region
      %s888 = ssub.s32 4096, 4096
      %889 = vsyncadd [#allocation8], %s888
      %s890 = sshll.u32 [#allocation12], 4
      %s891 = int_to_ptr.vmem [resolvable:$true] %s890
      %896 = dma.vmem_to_hbm [thread:$0]  %s891, 4096, %s3, [#allocation8], 128, 128, 8
    $region29: #{tpu_custom_call.1} parent=1 // pred_fallthru
      _
    // Predicated region
    $region30: #{tpu_custom_call.1} parent=1 // pred_check
      _
    $region31: #{tpu_custom_call.1} parent=1 // pred_check_branch
      %898 = sbr.rel (0) target = $region33
    $region32: #{tpu_custom_call.1} parent=1 // pred_region
      %899 = dma.done [#allocation8], 4096
    $region33: #{tpu_custom_call.1} parent=1 // pred_fallthru
      _
    %900 = vsyncpa [#allocation7], 1
    %901 = vsyncpa [#allocation10], 1
    %902 = vsyncpa [#allocation8], 1

</llo_original>
